<compile_context>
chip_gen: v7x
topology: tpu7x:2x2x1
jax: 0.10.0
libtpu: 0.0.40
codegen_flags: <defaults>
</compile_context>

<pallas_src>
import jax
import jax.numpy as jnp
from jax.experimental import pallas as pl
from jax.experimental.pallas import tpu as pltpu

IN_FEATURES = 4096
HIDDEN = 128
OUT_FEATURES = 2
OUT_PAD = 128          # lane-dense padded output width
TB_MAX = 512           # max batch tile (fits v7x 64 MiB VMEM with f32 x tiles)


def _round_up(v, m):
    return ((v + m - 1) // m) * m


def fc_classify_kernel(x_ref, w1_ref, b1_ref, w2_ref, b2_ref, o_ref):
    # Linear(4096, 128): in-kernel cast to bf16 (cheap VPU work hidden under the
    # x DMA), bf16 x bf16 on the MXU, f32 accumulate; bias + ReLU in f32.
    x_bf = x_ref[...].astype(jnp.bfloat16)
    h = jnp.dot(x_bf, w1_ref[...], preferred_element_type=jnp.float32)
    h = jnp.maximum(h + b1_ref[...], 0.0)

    # Dropout(p=0.5): identity at inference (eval mode).
    # TODO(synk): training-mode dropout via pltpu.prng_seed / prng_random_bits if needed.

    # Linear(128, 2) padded to 128 output lanes (bf16 operands -> no f32 MXU
    # emulation on v5e), f32 accumulate, then the outer F.relu().
    o = jnp.dot(h.astype(jnp.bfloat16), w2_ref[...],
                preferred_element_type=jnp.float32)
    o_ref[...] = jnp.maximum(o + b2_ref[...], 0.0).astype(o_ref.dtype)


def prepare_params(w1, b1, w2, b2):
    """One-time parameter conversion. Call at load/init time, NOT per forward.

    w1: (4096,128), b1: (1,128) or (128,), w2: (128,2), b2: (1,2) or (2,).
    Returns (w1_bf16, b1_f32, w2_bf16_padded, b2_f32_padded).
    """
    w1_bf = w1.astype(jnp.bfloat16)
    b1_f = jnp.asarray(b1, jnp.float32).reshape(1, HIDDEN)
    w2_p = jnp.zeros((HIDDEN, OUT_PAD), jnp.bfloat16).at[:, :OUT_FEATURES].set(
        w2.astype(jnp.bfloat16))
    b2_p = jnp.zeros((1, OUT_PAD), jnp.float32).at[:, :OUT_FEATURES].set(
        jnp.asarray(b2, jnp.float32).reshape(1, OUT_FEATURES))
    return w1_bf, b1_f, w2_p, b2_p


def fc_classify(x, w1_bf, b1_f, w2_p, b2_p, *, tb_max=TB_MAX):
    """x: (B, 4096) f32 or bf16; remaining args from prepare_params()."""
    B = x.shape[0]
    x_bytes = jnp.dtype(x.dtype).itemsize

    # Adaptive batch tile: no 256-row blowup for tiny batches, no wrapper-side
    # padding of x (Pallas handles the partial last block; OOB output rows are
    # discarded by the clamped writeback DMA).
    tb = min(tb_max, _round_up(max(B, 1), 16))
    grid = (pl.cdiv(B, tb),)

    cost = pl.CostEstimate(
        flops=2 * B * IN_FEATURES * HIDDEN + 2 * B * HIDDEN * OUT_PAD,
        transcendentals=0,
        bytes_accessed=(B * IN_FEATURES * x_bytes        # x (native dtype)
                        + IN_FEATURES * HIDDEN * 2       # w1 (bf16)
                        + HIDDEN * 4                     # b1 (f32)
                        + HIDDEN * OUT_PAD * 2           # w2 (bf16, padded)
                        + OUT_PAD * 4                    # b2 (f32, padded)
                        + B * OUT_PAD * 2),              # out (bf16, padded)
    )

    out = pl.pallas_call(
        fc_classify_kernel,
        out_shape=jax.ShapeDtypeStruct((B, OUT_PAD), jnp.bfloat16),
        grid=grid,
        in_specs=[
            pl.BlockSpec((tb, IN_FEATURES), lambda i: (i, 0)),         # x: batch-tiled
            pl.BlockSpec((IN_FEATURES, HIDDEN), lambda i: (0, 0)),     # w1: resident
            pl.BlockSpec((1, HIDDEN), lambda i: (0, 0)),               # b1: resident
            pl.BlockSpec((HIDDEN, OUT_PAD), lambda i: (0, 0)),         # w2: resident
            pl.BlockSpec((1, OUT_PAD), lambda i: (0, 0)),              # b2: resident
        ],
        out_specs=pl.BlockSpec((tb, OUT_PAD), lambda i: (i, 0)),
        compiler_params=pltpu.CompilerParams(
            dimension_semantics=("parallel",),       # batch tiles -> both TCs on v7x
            vmem_limit_bytes=48 * 1024 * 1024,       # > v5e/v6e scoped defaults,
                                                     # < v7x 64 MiB physical
        ),
        cost_estimate=cost,
    )(x, w1_bf, b1_f, w2_p, b2_p)

    # Strip the lane padding of the 2-wide head; tiny (B,2) cast back to f32.
    return out[:, :OUT_FEATURES].astype(jnp.float32)


def init_params(key):
    """PyTorch-default-style init: U(-1/sqrt(fan_in), 1/sqrt(fan_in)); weights pre-transposed."""
    k1, k2, k3, k4 = jax.random.split(key, 4)
    bound1 = 1.0 / jnp.sqrt(jnp.float32(IN_FEATURES))
    bound2 = 1.0 / jnp.sqrt(jnp.float32(HIDDEN))
    w1 = jax.random.uniform(k1, (IN_FEATURES, HIDDEN), jnp.float32, -bound1, bound1)
    b1 = jax.random.uniform(k2, (1, HIDDEN), jnp.float32, -bound1, bound1)
    w2 = jax.random.uniform(k3, (HIDDEN, OUT_FEATURES), jnp.float32, -bound2, bound2)
    b2 = jax.random.uniform(k4, (1, OUT_FEATURES), jnp.float32, -bound2, bound2)
    return w1, b1, w2, b2


def fc_classify_ref(x, w1, b1, w2, b2):
    # Pure-JAX reference matching the kernel's numerics (bf16 matmul inputs,
    # f32 accumulate/bias/ReLU, bf16 output storage).
    xb = x.astype(jnp.bfloat16).astype(jnp.float32)
    w1b = w1.astype(jnp.bfloat16).astype(jnp.float32)
    h = jnp.maximum(xb @ w1b + b1, 0.0)
    hb = h.astype(jnp.bfloat16).astype(jnp.float32)
    w2b = w2.astype(jnp.bfloat16).astype(jnp.float32)
    o = jnp.maximum(hb @ w2b + b2, 0.0)
    return o.astype(jnp.bfloat16).astype(jnp.float32)


if __name__ == "__main__":
    key = jax.random.PRNGKey(0)
    kx, kp = jax.random.split(key)

    B = 2  # small batch; feature dim 4096 is fixed by the module
    x = jax.random.normal(kx, (B, IN_FEATURES), dtype=jnp.float32)
    w1, b1, w2, b2 = init_params(kp)

    # One-time weight conversion, hoisted out of the per-call hot path.
    w1_bf, b1_f, w2_p, b2_p = prepare_params(w1, b1, w2, b2)

    out = fc_classify(x, w1_bf, b1_f, w2_p, b2_p)
    out = jax.block_until_ready(out)

    ref = fc_classify_ref(x, w1, b1, w2, b2)
    assert out.shape == (B, OUT_FEATURES)
    assert jnp.allclose(out, ref, atol=2e-2, rtol=2e-2), "mismatch vs JAX reference"

    print("KERNEL_OK")
</pallas_src>

<mosaic_0001>
module attributes {stable_mosaic.version = 11 : i64} {
  func.func @fc_classify_kernel(%arg0: i32, %arg1: memref<16x4096xf32, #tpu.memory_space<vmem>>, %arg2: memref<4096x128xbf16, #tpu.memory_space<vmem>>, %arg3: memref<1x128xf32, #tpu.memory_space<vmem>>, %arg4: memref<128x128xbf16, #tpu.memory_space<vmem>>, %arg5: memref<1x128xf32, #tpu.memory_space<vmem>>, %arg6: memref<16x128xbf16, #tpu.memory_space<vmem>>) attributes {dimension_semantics = [#tpu.dimension_semantics<parallel>], iteration_bounds = array<i64: 1>, scalar_prefetch = 0 : i64, scratch_operands = 0 : i64, tpu.core_type = #tpu.core_type<tc>, window_params = [{transform_indices = @transform_0, window_bounds = array<i64: 16, 4096>}, {pipeline_mode = #tpu.pipeline_mode<synchronous>, transform_indices = @transform_1, window_bounds = array<i64: 4096, 128>}, {pipeline_mode = #tpu.pipeline_mode<synchronous>, transform_indices = @transform_2, window_bounds = array<i64: 1, 128>}, {pipeline_mode = #tpu.pipeline_mode<synchronous>, transform_indices = @transform_3, window_bounds = array<i64: 128, 128>}, {pipeline_mode = #tpu.pipeline_mode<synchronous>, transform_indices = @transform_4, window_bounds = array<i64: 1, 128>}, {transform_indices = @transform_5, window_bounds = array<i64: 16, 128>}]} {
    %c0 = arith.constant 0 : index
    %c0_0 = arith.constant 0 : index
    %0 = vector.load %arg1[%c0, %c0_0] : memref<16x4096xf32, #tpu.memory_space<vmem>>, vector<16x4096xf32>
    %1 = arith.truncf %0 : vector<16x4096xf32> to vector<16x4096xbf16>
    %c0_1 = arith.constant 0 : index
    %c0_2 = arith.constant 0 : index
    %2 = vector.load %arg2[%c0_1, %c0_2] : memref<4096x128xbf16, #tpu.memory_space<vmem>>, vector<4096x128xbf16>
    %cst = arith.constant dense<0.000000e+00> : vector<16x128xf32>
    %3 = tpu.matmul %1, %2, %cst {dimension_numbers = #tpu.dot_dimension_numbers<[1], [0], [0], [1], [0, 0, 1, 1], [], []>} : vector<16x4096xbf16>, vector<4096x128xbf16>, vector<16x128xf32> -> vector<16x128xf32>
    %c0_3 = arith.constant 0 : index
    %c0_4 = arith.constant 0 : index
    %4 = vector.load %arg3[%c0_3, %c0_4] : memref<1x128xf32, #tpu.memory_space<vmem>>, vector<1x128xf32>
    %5 = vector.broadcast %4 : vector<1x128xf32> to vector<16x128xf32>
    %6 = arith.addf %3, %5 : vector<16x128xf32>
    %cst_5 = arith.constant 0.000000e+00 : f32
    %7 = vector.broadcast %cst_5 : f32 to vector<16x128xf32>
    %8 = arith.maximumf %6, %7 : vector<16x128xf32>
    %9 = arith.truncf %8 : vector<16x128xf32> to vector<16x128xbf16>
    %c0_6 = arith.constant 0 : index
    %c0_7 = arith.constant 0 : index
    %10 = vector.load %arg4[%c0_6, %c0_7] : memref<128x128xbf16, #tpu.memory_space<vmem>>, vector<128x128xbf16>
    %cst_8 = arith.constant dense<0.000000e+00> : vector<16x128xf32>
    %11 = tpu.matmul %9, %10, %cst_8 {dimension_numbers = #tpu.dot_dimension_numbers<[1], [0], [0], [1], [0, 0, 1, 1], [], []>} : vector<16x128xbf16>, vector<128x128xbf16>, vector<16x128xf32> -> vector<16x128xf32>
    %c0_9 = arith.constant 0 : index
    %c0_10 = arith.constant 0 : index
    %12 = vector.load %arg5[%c0_9, %c0_10] : memref<1x128xf32, #tpu.memory_space<vmem>>, vector<1x128xf32>
    %13 = vector.broadcast %12 : vector<1x128xf32> to vector<16x128xf32>
    %14 = arith.addf %11, %13 : vector<16x128xf32>
    %cst_11 = arith.constant 0.000000e+00 : f32
    %15 = vector.broadcast %cst_11 : f32 to vector<16x128xf32>
    %16 = arith.maximumf %14, %15 : vector<16x128xf32>
    %17 = arith.truncf %16 : vector<16x128xf32> to vector<16x128xbf16>
    %c0_12 = arith.constant 0 : index
    %c0_13 = arith.constant 0 : index
    %18 = vector.load %arg6[%c0_12, %c0_13] : memref<16x128xbf16, #tpu.memory_space<vmem>>, vector<16x128xbf16>
    tpu.vector_store %arg6[%c0_12, %c0_13], %17 {strides = array<i32>} : memref<16x128xbf16, #tpu.memory_space<vmem>>, vector<16x128xbf16>,
    return
  }
  func.func @transform_0(%arg0: i32) -> (i32, i32) {
    %c0_i32 = arith.constant 0 : i32
    %c0_i32_0 = arith.constant 0 : i32
    return %arg0, %c0_i32 : i32, i32
  }
  func.func @transform_1(%arg0: i32) -> (i32, i32) {
    %c0_i32 = arith.constant 0 : i32
    %c0_i32_0 = arith.constant 0 : i32
    %c0_i32_1 = arith.constant 0 : i32
    return %c0_i32, %c0_i32_0 : i32, i32
  }
  func.func @transform_2(%arg0: i32) -> (i32, i32) {
    %c0_i32 = arith.constant 0 : i32
    %c0_i32_0 = arith.constant 0 : i32
    %c0_i32_1 = arith.constant 0 : i32
    return %c0_i32, %c0_i32_0 : i32, i32
  }
  func.func @transform_3(%arg0: i32) -> (i32, i32) {
    %c0_i32 = arith.constant 0 : i32
    %c0_i32_0 = arith.constant 0 : i32
    %c0_i32_1 = arith.constant 0 : i32
    return %c0_i32, %c0_i32_0 : i32, i32
  }
  func.func @transform_4(%arg0: i32) -> (i32, i32) {
    %c0_i32 = arith.constant 0 : i32
    %c0_i32_0 = arith.constant 0 : i32
    %c0_i32_1 = arith.constant 0 : i32
    return %c0_i32, %c0_i32_0 : i32, i32
  }
  func.func @transform_5(%arg0: i32) -> (i32, i32) {
    %c0_i32 = arith.constant 0 : i32
    %c0_i32_0 = arith.constant 0 : i32
    return %arg0, %c0_i32 : i32, i32
  }
}

</mosaic_0001>

<llo_original>
// kernel: tpu_custom_call.1
$region0: #{tpu_custom_call.1}
  #allocation0 [shape = 'u32[]', space=smem, size = 0x4, offset = 0x4, fixed_abs, tag = 'smem constant byte address 0x4 - core index']
  #allocation1 [shape = 'u32[144,128]{1,0:T(1,128)}', space=vmem, size = 0x12000, scoped, tag = 'internal scratch']
  %s0 = inlined_call_operand.hbm [shape: f32[2,4096], index: 0, kind: input, shape index: {}]
  %s1 = inlined_call_operand.hbm [shape: bf16[4096,128], index: 1, kind: input, shape index: {}]
  %s2 = inlined_call_operand.vmem [shape: f32[1,128], index: 2, kind: input, shape index: {}]
  %s3 = inlined_call_operand.hbm [shape: bf16[128,128], index: 3, kind: input, shape index: {}]
  %s4 = inlined_call_operand.vmem [shape: f32[1,128], index: 4, kind: input, shape index: {}]
  %s5 = inlined_call_operand.hbm [shape: bf16[2,128], index: 5, kind: output, shape index: {}]
  %s6 = sld [smem:[#allocation0]]
  $region42: #{tpu_custom_call.1} parent=0
    _
  %s8 = ssub.s32 1, %s6
  %s9 = scalar_select 0, %s8, %s6
  $region1: #{tpu_custom_call.1} parent=0
    #allocation2 [shape = 'u8[262144]{0}', space=vmem, size = 0x40000, scoped, tag = 'input window, operand 0, single buffered']
    #allocation3 [shape = 's32[1]{0}', space=sflag, size = 0x4, scoped, tag = 'scoped memory for tpu_custom_call.1']
    #allocation4 [shape = 's32[1]{0}', space=sflag, size = 0x4, scoped, tag = 'scoped memory for tpu_custom_call.1']
    #allocation5 [shape = 'u8[1048576]{0}', space=vmem, size = 0x100000, scoped, tag = 'input window, operand 1, single buffered']
    #allocation6 [shape = 's32[1]{0}', space=sflag, size = 0x4, scoped, tag = 'scoped memory for tpu_custom_call.1']
    #allocation7 [shape = 'u8[32768]{0}', space=vmem, size = 0x8000, scoped, tag = 'input window, operand 3, single buffered']
    #allocation8 [shape = 'u8[4096]{0}', space=vmem, size = 0x1000, scoped, tag = 'output window, operand 0, single buffered']
    %10 = vsyncpa [#allocation3], 0
    %11 = vsyncpa [#allocation6], 0
    %12 = vsyncpa [#allocation4], 0
    // Predicated region
    $region2: #{tpu_custom_call.1} parent=1 // pred_check
      _
    $region3: #{tpu_custom_call.1} parent=1 // pred_check_branch
      %14 = sbr.rel (0) target = $region5
    $region4: #{tpu_custom_call.1} parent=1 // pred_region
      %s16 = ssub.s32 8192, 1024
      %17 = vsyncadd [#allocation3], %s16
      %s18 = sshll.u32 [#allocation2], 4
      %s19 = int_to_ptr.vmem [resolvable:$true] %s18
      %24 = dma.hbm_to_vmem [thread:$0]  %s0, 1024, %s19, [#allocation3], 1024, 1024, 64
    $region5: #{tpu_custom_call.1} parent=1 // pred_fallthru
      _
    // Predicated region
    $region6: #{tpu_custom_call.1} parent=1 // pred_check
      _
    $region7: #{tpu_custom_call.1} parent=1 // pred_check_branch
      %26 = sbr.rel (0) target = $region9
    $region8: #{tpu_custom_call.1} parent=1 // pred_region
      %s28 = ssub.s32 32768, 32768
      %29 = vsyncadd [#allocation6], %s28
      %s30 = sshll.u32 [#allocation5], 4
      %s31 = int_to_ptr.vmem [resolvable:$true] %s30
      %36 = dma.hbm_to_vmem [thread:$0]  %s1, 32768, %s31, [#allocation6], 64, 64, 4
    $region9: #{tpu_custom_call.1} parent=1 // pred_fallthru
      _
    // Predicated region
    $region10: #{tpu_custom_call.1} parent=1 // pred_check
      _
    $region11: #{tpu_custom_call.1} parent=1 // pred_check_branch
      %38 = sbr.rel (0) target = $region13
    $region12: #{tpu_custom_call.1} parent=1 // pred_region
      _
    $region13: #{tpu_custom_call.1} parent=1 // pred_fallthru
      _
    // Predicated region
    $region14: #{tpu_custom_call.1} parent=1 // pred_check
      _
    $region15: #{tpu_custom_call.1} parent=1 // pred_check_branch
      %40 = sbr.rel (0) target = $region17
    $region16: #{tpu_custom_call.1} parent=1 // pred_region
      %s42 = ssub.s32 1024, 1024
      %43 = vsyncadd [#allocation6], %s42
      %s44 = sshll.u32 [#allocation7], 4
      %s45 = int_to_ptr.vmem [resolvable:$true] %s44
      %50 = dma.hbm_to_vmem [thread:$0]  %s3, 1024, %s45, [#allocation6], 64, 64, 4
    $region17: #{tpu_custom_call.1} parent=1 // pred_fallthru
      _
    // Predicated region
    $region18: #{tpu_custom_call.1} parent=1 // pred_check
      _
    $region19: #{tpu_custom_call.1} parent=1 // pred_check_branch
      %52 = sbr.rel (0) target = $region21
    $region20: #{tpu_custom_call.1} parent=1 // pred_region
      _
    $region21: #{tpu_custom_call.1} parent=1 // pred_fallthru
      _
    // Predicated region
    $region22: #{tpu_custom_call.1} parent=1 // pred_check
      _
    $region23: #{tpu_custom_call.1} parent=1 // pred_check_branch
      %54 = sbr.rel (0) target = $region25
    $region24: #{tpu_custom_call.1} parent=1 // pred_region
      %55 = dma.done [#allocation3], 8192
    $region25: #{tpu_custom_call.1} parent=1 // pred_fallthru
      _
    // Predicated region
    $region26: #{tpu_custom_call.1} parent=1 // pred_check
      _
    $region27: #{tpu_custom_call.1} parent=1 // pred_check_branch
      %57 = sbr.rel (0) target = $region29
    $region28: #{tpu_custom_call.1} parent=1 // pred_region
      %58 = dma.done [#allocation6], 32768
    $region29: #{tpu_custom_call.1} parent=1 // pred_fallthru
      _
    // Predicated region
    $region30: #{tpu_custom_call.1} parent=1 // pred_check
      _
    $region31: #{tpu_custom_call.1} parent=1 // pred_check_branch
      %60 = sbr.rel (0) target = $region33
    $region32: #{tpu_custom_call.1} parent=1 // pred_region
      %61 = dma.done [#allocation6], 1024
    $region33: #{tpu_custom_call.1} parent=1 // pred_fallthru
      _
    %v63 = vld [vmem:[#allocation2] sm:$0xff]
    %v64 = vld [vmem:[#allocation2 + $0x8] sm:$0xff]
    %v65 = vld [vmem:[#allocation2 + $0x10] sm:$0xff]
    %v66 = vld [vmem:[#allocation2 + $0x18] sm:$0xff]
    %v67 = vld [vmem:[#allocation2 + $0x20] sm:$0xff]
    %v68 = vld [vmem:[#allocation2 + $0x28] sm:$0xff]
    %v69 = vld [vmem:[#allocation2 + $0x30] sm:$0xff]
    %v70 = vld [vmem:[#allocation2 + $0x38] sm:$0xff]
    %v71 = vld [vmem:[#allocation2 + $0x40] sm:$0xff]
    %v72 = vld [vmem:[#allocation2 + $0x48] sm:$0xff]
    %v73 = vld [vmem:[#allocation2 + $0x50] sm:$0xff]
    %v74 = vld [vmem:[#allocation2 + $0x58] sm:$0xff]
    %v75 = vld [vmem:[#allocation2 + $0x60] sm:$0xff]
    %v76 = vld [vmem:[#allocation2 + $0x68] sm:$0xff]
    %v77 = vld [vmem:[#allocation2 + $0x70] sm:$0xff]
    %v78 = vld [vmem:[#allocation2 + $0x78] sm:$0xff]
    %v79 = vld [vmem:[#allocation2 + $0x80] sm:$0xff]
    %v80 = vld [vmem:[#allocation2 + $0x88] sm:$0xff]
    %v81 = vld [vmem:[#allocation2 + $0x90] sm:$0xff]
    %v82 = vld [vmem:[#allocation2 + $0x98] sm:$0xff]
    %v83 = vld [vmem:[#allocation2 + $0xa0] sm:$0xff]
    %v84 = vld [vmem:[#allocation2 + $0xa8] sm:$0xff]
    %v85 = vld [vmem:[#allocation2 + $0xb0] sm:$0xff]
    %v86 = vld [vmem:[#allocation2 + $0xb8] sm:$0xff]
    %v87 = vld [vmem:[#allocation2 + $0xc0] sm:$0xff]
    %v88 = vld [vmem:[#allocation2 + $0xc8] sm:$0xff]
    %v89 = vld [vmem:[#allocation2 + $0xd0] sm:$0xff]
    %v90 = vld [vmem:[#allocation2 + $0xd8] sm:$0xff]
    %v91 = vld [vmem:[#allocation2 + $0xe0] sm:$0xff]
    %v92 = vld [vmem:[#allocation2 + $0xe8] sm:$0xff]
    %v93 = vld [vmem:[#allocation2 + $0xf0] sm:$0xff]
    %v94 = vld [vmem:[#allocation2 + $0xf8] sm:$0xff]
    %v95 = vld [vmem:[#allocation2 + $0x100] sm:$0xff]
    %v96 = vld [vmem:[#allocation2 + $0x108] sm:$0xff]
    %v97 = vld [vmem:[#allocation2 + $0x110] sm:$0xff]
    %v98 = vld [vmem:[#allocation2 + $0x118] sm:$0xff]
    %v99 = vld [vmem:[#allocation2 + $0x120] sm:$0xff]
    %v100 = vld [vmem:[#allocation2 + $0x128] sm:$0xff]
    %v101 = vld [vmem:[#allocation2 + $0x130] sm:$0xff]
    %v102 = vld [vmem:[#allocation2 + $0x138] sm:$0xff]
    %v103 = vld [vmem:[#allocation2 + $0x140] sm:$0xff]
    %v104 = vld [vmem:[#allocation2 + $0x148] sm:$0xff]
    %v105 = vld [vmem:[#allocation2 + $0x150] sm:$0xff]
    %v106 = vld [vmem:[#allocation2 + $0x158] sm:$0xff]
    %v107 = vld [vmem:[#allocation2 + $0x160] sm:$0xff]
    %v108 = vld [vmem:[#allocation2 + $0x168] sm:$0xff]
    %v109 = vld [vmem:[#allocation2 + $0x170] sm:$0xff]
    %v110 = vld [vmem:[#allocation2 + $0x178] sm:$0xff]
    %v111 = vld [vmem:[#allocation2 + $0x180] sm:$0xff]
    %v112 = vld [vmem:[#allocation2 + $0x188] sm:$0xff]
    %v113 = vld [vmem:[#allocation2 + $0x190] sm:$0xff]
    %v114 = vld [vmem:[#allocation2 + $0x198] sm:$0xff]
    %v115 = vld [vmem:[#allocation2 + $0x1a0] sm:$0xff]
    %v116 = vld [vmem:[#allocation2 + $0x1a8] sm:$0xff]
    %v117 = vld [vmem:[#allocation2 + $0x1b0] sm:$0xff]
    %v118 = vld [vmem:[#allocation2 + $0x1b8] sm:$0xff]
    %v119 = vld [vmem:[#allocation2 + $0x1c0] sm:$0xff]
    %v120 = vld [vmem:[#allocation2 + $0x1c8] sm:$0xff]
    %v121 = vld [vmem:[#allocation2 + $0x1d0] sm:$0xff]
    %v122 = vld [vmem:[#allocation2 + $0x1d8] sm:$0xff]
    %v123 = vld [vmem:[#allocation2 + $0x1e0] sm:$0xff]
    %v124 = vld [vmem:[#allocation2 + $0x1e8] sm:$0xff]
    %v125 = vld [vmem:[#allocation2 + $0x1f0] sm:$0xff]
    %v126 = vld [vmem:[#allocation2 + $0x1f8] sm:$0xff]
    %v191 = vcombine.low %v63, %v71
    %v192 = vcombine.high %v63, %v71
    %v193 = vcombine.low %v79, %v87
    %v194 = vcombine.high %v79, %v87
    %v196 = vunpack.c.l.s4 1983009808
    %v197 = vunpack.c.0.s8 %v196
    %v198 = vlaneseq
    %v199 = vshrl.u32 %v198, 7
    %v200 = vsub.s32 %v197, %v199
    %v201 = vrot.slane %v191, %v200
    %v203 = vunpack.c.l.s4 1983009808
    %v204 = vunpack.c.0.s8 %v203
    %v205 = vlaneseq
    %v206 = vshrl.u32 %v205, 7
    %v207 = vsub.s32 %v204, %v206
    %v208 = vrot.slane %v192, %v207
    %v210 = vunpack.c.l.s4 1983009808
    %v211 = vunpack.c.0.s8 %v210
    %v212 = vlaneseq
    %v213 = vshrl.u32 %v212, 7
    %v214 = vsub.s32 %v211, %v213
    %v215 = vrot.slane %v193, %v214
    %v217 = vunpack.c.l.s4 1983009808
    %v218 = vunpack.c.0.s8 %v217
    %v219 = vlaneseq
    %v220 = vshrl.u32 %v219, 7
    %v221 = vsub.s32 %v218, %v220
    %v222 = vrot.slane %v194, %v221
    %v223 = vcombine.low %v201, %v215
    %v224 = vcombine.high %v201, %v215
    %v225 = vcombine.low %v208, %v222
    %v226 = vcombine.high %v208, %v222
    %v227 = vcombine.low %v64, %v72
    %v228 = vcombine.high %v64, %v72
    %v229 = vcombine.low %v80, %v88
    %v230 = vcombine.high %v80, %v88
    %v232 = vunpack.c.l.s4 1983009808
    %v233 = vunpack.c.0.s8 %v232
    %v234 = vlaneseq
    %v235 = vshrl.u32 %v234, 7
    %v236 = vsub.s32 %v233, %v235
    %v237 = vrot.slane %v227, %v236
    %v239 = vunpack.c.l.s4 1983009808
    %v240 = vunpack.c.0.s8 %v239
    %v241 = vlaneseq
    %v242 = vshrl.u32 %v241, 7
    %v243 = vsub.s32 %v240, %v242
    %v244 = vrot.slane %v228, %v243
    %v246 = vunpack.c.l.s4 1983009808
    %v247 = vunpack.c.0.s8 %v246
    %v248 = vlaneseq
    %v249 = vshrl.u32 %v248, 7
    %v250 = vsub.s32 %v247, %v249
    %v251 = vrot.slane %v229, %v250
    %v253 = vunpack.c.l.s4 1983009808
    %v254 = vunpack.c.0.s8 %v253
    %v255 = vlaneseq
    %v256 = vshrl.u32 %v255, 7
    %v257 = vsub.s32 %v254, %v256
    %v258 = vrot.slane %v230, %v257
    %v259 = vcombine.low %v237, %v251
    %v260 = vcombine.high %v237, %v251
    %v261 = vcombine.low %v244, %v258
    %v262 = vcombine.high %v244, %v258
    %v263 = vcombine.low %v65, %v73
    %v264 = vcombine.high %v65, %v73
    %v265 = vcombine.low %v81, %v89
    %v266 = vcombine.high %v81, %v89
    %v268 = vunpack.c.l.s4 1983009808
    %v269 = vunpack.c.0.s8 %v268
    %v270 = vlaneseq
    %v271 = vshrl.u32 %v270, 7
    %v272 = vsub.s32 %v269, %v271
    %v273 = vrot.slane %v263, %v272
    %v275 = vunpack.c.l.s4 1983009808
    %v276 = vunpack.c.0.s8 %v275
    %v277 = vlaneseq
    %v278 = vshrl.u32 %v277, 7
    %v279 = vsub.s32 %v276, %v278
    %v280 = vrot.slane %v264, %v279
    %v282 = vunpack.c.l.s4 1983009808
    %v283 = vunpack.c.0.s8 %v282
    %v284 = vlaneseq
    %v285 = vshrl.u32 %v284, 7
    %v286 = vsub.s32 %v283, %v285
    %v287 = vrot.slane %v265, %v286
    %v289 = vunpack.c.l.s4 1983009808
    %v290 = vunpack.c.0.s8 %v289
    %v291 = vlaneseq
    %v292 = vshrl.u32 %v291, 7
    %v293 = vsub.s32 %v290, %v292
    %v294 = vrot.slane %v266, %v293
    %v295 = vcombine.low %v273, %v287
    %v296 = vcombine.high %v273, %v287
    %v297 = vcombine.low %v280, %v294
    %v298 = vcombine.high %v280, %v294
    %v299 = vcombine.low %v66, %v74
    %v300 = vcombine.high %v66, %v74
    %v301 = vcombine.low %v82, %v90
    %v302 = vcombine.high %v82, %v90
    %v304 = vunpack.c.l.s4 1983009808
    %v305 = vunpack.c.0.s8 %v304
    %v306 = vlaneseq
    %v307 = vshrl.u32 %v306, 7
    %v308 = vsub.s32 %v305, %v307
    %v309 = vrot.slane %v299, %v308
    %v311 = vunpack.c.l.s4 1983009808
    %v312 = vunpack.c.0.s8 %v311
    %v313 = vlaneseq
    %v314 = vshrl.u32 %v313, 7
    %v315 = vsub.s32 %v312, %v314
    %v316 = vrot.slane %v300, %v315
    %v318 = vunpack.c.l.s4 1983009808
    %v319 = vunpack.c.0.s8 %v318
    %v320 = vlaneseq
    %v321 = vshrl.u32 %v320, 7
    %v322 = vsub.s32 %v319, %v321
    %v323 = vrot.slane %v301, %v322
    %v325 = vunpack.c.l.s4 1983009808
    %v326 = vunpack.c.0.s8 %v325
    %v327 = vlaneseq
    %v328 = vshrl.u32 %v327, 7
    %v329 = vsub.s32 %v326, %v328
    %v330 = vrot.slane %v302, %v329
    %v331 = vcombine.low %v309, %v323
    %v332 = vcombine.high %v309, %v323
    %v333 = vcombine.low %v316, %v330
    %v334 = vcombine.high %v316, %v330
    %v335 = vcombine.low %v67, %v75
    %v336 = vcombine.high %v67, %v75
    %v337 = vcombine.low %v83, %v91
    %v338 = vcombine.high %v83, %v91
    %v340 = vunpack.c.l.s4 1983009808
    %v341 = vunpack.c.0.s8 %v340
    %v342 = vlaneseq
    %v343 = vshrl.u32 %v342, 7
    %v344 = vsub.s32 %v341, %v343
    %v345 = vrot.slane %v335, %v344
    %v347 = vunpack.c.l.s4 1983009808
    %v348 = vunpack.c.0.s8 %v347
    %v349 = vlaneseq
    %v350 = vshrl.u32 %v349, 7
    %v351 = vsub.s32 %v348, %v350
    %v352 = vrot.slane %v336, %v351
    %v354 = vunpack.c.l.s4 1983009808
    %v355 = vunpack.c.0.s8 %v354
    %v356 = vlaneseq
    %v357 = vshrl.u32 %v356, 7
    %v358 = vsub.s32 %v355, %v357
    %v359 = vrot.slane %v337, %v358
    %v361 = vunpack.c.l.s4 1983009808
    %v362 = vunpack.c.0.s8 %v361
    %v363 = vlaneseq
    %v364 = vshrl.u32 %v363, 7
    %v365 = vsub.s32 %v362, %v364
    %v366 = vrot.slane %v338, %v365
    %v367 = vcombine.low %v345, %v359
    %v368 = vcombine.high %v345, %v359
    %v369 = vcombine.low %v352, %v366
    %v370 = vcombine.high %v352, %v366
    %v371 = vcombine.low %v68, %v76
    %v372 = vcombine.high %v68, %v76
    %v373 = vcombine.low %v84, %v92
    %v374 = vcombine.high %v84, %v92
    %v376 = vunpack.c.l.s4 1983009808
    %v377 = vunpack.c.0.s8 %v376
    %v378 = vlaneseq
    %v379 = vshrl.u32 %v378, 7
    %v380 = vsub.s32 %v377, %v379
    %v381 = vrot.slane %v371, %v380
    %v383 = vunpack.c.l.s4 1983009808
    %v384 = vunpack.c.0.s8 %v383
    %v385 = vlaneseq
    %v386 = vshrl.u32 %v385, 7
    %v387 = vsub.s32 %v384, %v386
    %v388 = vrot.slane %v372, %v387
    %v390 = vunpack.c.l.s4 1983009808
    %v391 = vunpack.c.0.s8 %v390
    %v392 = vlaneseq
    %v393 = vshrl.u32 %v392, 7
    %v394 = vsub.s32 %v391, %v393
    %v395 = vrot.slane %v373, %v394
    %v397 = vunpack.c.l.s4 1983009808
    %v398 = vunpack.c.0.s8 %v397
    %v399 = vlaneseq
    %v400 = vshrl.u32 %v399, 7
    %v401 = vsub.s32 %v398, %v400
    %v402 = vrot.slane %v374, %v401
    %v403 = vcombine.low %v381, %v395
    %v404 = vcombine.high %v381, %v395
    %v405 = vcombine.low %v388, %v402
    %v406 = vcombine.high %v388, %v402
    %v407 = vcombine.low %v69, %v77
    %v408 = vcombine.high %v69, %v77
    %v409 = vcombine.low %v85, %v93
    %v410 = vcombine.high %v85, %v93
    %v412 = vunpack.c.l.s4 1983009808
    %v413 = vunpack.c.0.s8 %v412
    %v414 = vlaneseq
    %v415 = vshrl.u32 %v414, 7
    %v416 = vsub.s32 %v413, %v415
    %v417 = vrot.slane %v407, %v416
    %v419 = vunpack.c.l.s4 1983009808
    %v420 = vunpack.c.0.s8 %v419
    %v421 = vlaneseq
    %v422 = vshrl.u32 %v421, 7
    %v423 = vsub.s32 %v420, %v422
    %v424 = vrot.slane %v408, %v423
    %v426 = vunpack.c.l.s4 1983009808
    %v427 = vunpack.c.0.s8 %v426
    %v428 = vlaneseq
    %v429 = vshrl.u32 %v428, 7
    %v430 = vsub.s32 %v427, %v429
    %v431 = vrot.slane %v409, %v430
    %v433 = vunpack.c.l.s4 1983009808
    %v434 = vunpack.c.0.s8 %v433
    %v435 = vlaneseq
    %v436 = vshrl.u32 %v435, 7
    %v437 = vsub.s32 %v434, %v436
    %v438 = vrot.slane %v410, %v437
    %v439 = vcombine.low %v417, %v431
    %v440 = vcombine.high %v417, %v431
    %v441 = vcombine.low %v424, %v438
    %v442 = vcombine.high %v424, %v438
    %v443 = vcombine.low %v70, %v78
    %v444 = vcombine.high %v70, %v78
    %v445 = vcombine.low %v86, %v94
    %v446 = vcombine.high %v86, %v94
    %v448 = vunpack.c.l.s4 1983009808
    %v449 = vunpack.c.0.s8 %v448
    %v450 = vlaneseq
    %v451 = vshrl.u32 %v450, 7
    %v452 = vsub.s32 %v449, %v451
    %v453 = vrot.slane %v443, %v452
    %v455 = vunpack.c.l.s4 1983009808
    %v456 = vunpack.c.0.s8 %v455
    %v457 = vlaneseq
    %v458 = vshrl.u32 %v457, 7
    %v459 = vsub.s32 %v456, %v458
    %v460 = vrot.slane %v444, %v459
    %v462 = vunpack.c.l.s4 1983009808
    %v463 = vunpack.c.0.s8 %v462
    %v464 = vlaneseq
    %v465 = vshrl.u32 %v464, 7
    %v466 = vsub.s32 %v463, %v465
    %v467 = vrot.slane %v445, %v466
    %v469 = vunpack.c.l.s4 1983009808
    %v470 = vunpack.c.0.s8 %v469
    %v471 = vlaneseq
    %v472 = vshrl.u32 %v471, 7
    %v473 = vsub.s32 %v470, %v472
    %v474 = vrot.slane %v446, %v473
    %v475 = vcombine.low %v453, %v467
    %v476 = vcombine.high %v453, %v467
    %v477 = vcombine.low %v460, %v474
    %v478 = vcombine.high %v460, %v474
    %v479 = vcombine.low %v95, %v103
    %v480 = vcombine.high %v95, %v103
    %v481 = vcombine.low %v111, %v119
    %v482 = vcombine.high %v111, %v119
    %v484 = vunpack.c.l.s4 1983009808
    %v485 = vunpack.c.0.s8 %v484
    %v486 = vlaneseq
    %v487 = vshrl.u32 %v486, 7
    %v488 = vsub.s32 %v485, %v487
    %v489 = vrot.slane %v479, %v488
    %v491 = vunpack.c.l.s4 1983009808
    %v492 = vunpack.c.0.s8 %v491
    %v493 = vlaneseq
    %v494 = vshrl.u32 %v493, 7
    %v495 = vsub.s32 %v492, %v494
    %v496 = vrot.slane %v480, %v495
    %v498 = vunpack.c.l.s4 1983009808
    %v499 = vunpack.c.0.s8 %v498
    %v500 = vlaneseq
    %v501 = vshrl.u32 %v500, 7
    %v502 = vsub.s32 %v499, %v501
    %v503 = vrot.slane %v481, %v502
    %v505 = vunpack.c.l.s4 1983009808
    %v506 = vunpack.c.0.s8 %v505
    %v507 = vlaneseq
    %v508 = vshrl.u32 %v507, 7
    %v509 = vsub.s32 %v506, %v508
    %v510 = vrot.slane %v482, %v509
    %v511 = vcombine.low %v489, %v503
    %v512 = vcombine.high %v489, %v503
    %v513 = vcombine.low %v496, %v510
    %v514 = vcombine.high %v496, %v510
    %v515 = vcombine.low %v96, %v104
    %v516 = vcombine.high %v96, %v104
    %v517 = vcombine.low %v112, %v120
    %v518 = vcombine.high %v112, %v120
    %v520 = vunpack.c.l.s4 1983009808
    %v521 = vunpack.c.0.s8 %v520
    %v522 = vlaneseq
    %v523 = vshrl.u32 %v522, 7
    %v524 = vsub.s32 %v521, %v523
    %v525 = vrot.slane %v515, %v524
    %v527 = vunpack.c.l.s4 1983009808
    %v528 = vunpack.c.0.s8 %v527
    %v529 = vlaneseq
    %v530 = vshrl.u32 %v529, 7
    %v531 = vsub.s32 %v528, %v530
    %v532 = vrot.slane %v516, %v531
    %v534 = vunpack.c.l.s4 1983009808
    %v535 = vunpack.c.0.s8 %v534
    %v536 = vlaneseq
    %v537 = vshrl.u32 %v536, 7
    %v538 = vsub.s32 %v535, %v537
    %v539 = vrot.slane %v517, %v538
    %v541 = vunpack.c.l.s4 1983009808
    %v542 = vunpack.c.0.s8 %v541
    %v543 = vlaneseq
    %v544 = vshrl.u32 %v543, 7
    %v545 = vsub.s32 %v542, %v544
    %v546 = vrot.slane %v518, %v545
    %v547 = vcombine.low %v525, %v539
    %v548 = vcombine.high %v525, %v539
    %v549 = vcombine.low %v532, %v546
    %v550 = vcombine.high %v532, %v546
    %v551 = vcombine.low %v97, %v105
    %v552 = vcombine.high %v97, %v105
    %v553 = vcombine.low %v113, %v121
    %v554 = vcombine.high %v113, %v121
    %v556 = vunpack.c.l.s4 1983009808
    %v557 = vunpack.c.0.s8 %v556
    %v558 = vlaneseq
    %v559 = vshrl.u32 %v558, 7
    %v560 = vsub.s32 %v557, %v559
    %v561 = vrot.slane %v551, %v560
    %v563 = vunpack.c.l.s4 1983009808
    %v564 = vunpack.c.0.s8 %v563
    %v565 = vlaneseq
    %v566 = vshrl.u32 %v565, 7
    %v567 = vsub.s32 %v564, %v566
    %v568 = vrot.slane %v552, %v567
    %v570 = vunpack.c.l.s4 1983009808
    %v571 = vunpack.c.0.s8 %v570
    %v572 = vlaneseq
    %v573 = vshrl.u32 %v572, 7
    %v574 = vsub.s32 %v571, %v573
    %v575 = vrot.slane %v553, %v574
    %v577 = vunpack.c.l.s4 1983009808
    %v578 = vunpack.c.0.s8 %v577
    %v579 = vlaneseq
    %v580 = vshrl.u32 %v579, 7
    %v581 = vsub.s32 %v578, %v580
    %v582 = vrot.slane %v554, %v581
    %v583 = vcombine.low %v561, %v575
    %v584 = vcombine.high %v561, %v575
    %v585 = vcombine.low %v568, %v582
    %v586 = vcombine.high %v568, %v582
    %v587 = vcombine.low %v98, %v106
    %v588 = vcombine.high %v98, %v106
    %v589 = vcombine.low %v114, %v122
    %v590 = vcombine.high %v114, %v122
    %v592 = vunpack.c.l.s4 1983009808
    %v593 = vunpack.c.0.s8 %v592
    %v594 = vlaneseq
    %v595 = vshrl.u32 %v594, 7
    %v596 = vsub.s32 %v593, %v595
    %v597 = vrot.slane %v587, %v596
    %v599 = vunpack.c.l.s4 1983009808
    %v600 = vunpack.c.0.s8 %v599
    %v601 = vlaneseq
    %v602 = vshrl.u32 %v601, 7
    %v603 = vsub.s32 %v600, %v602
    %v604 = vrot.slane %v588, %v603
    %v606 = vunpack.c.l.s4 1983009808
    %v607 = vunpack.c.0.s8 %v606
    %v608 = vlaneseq
    %v609 = vshrl.u32 %v608, 7
    %v610 = vsub.s32 %v607, %v609
    %v611 = vrot.slane %v589, %v610
    %v613 = vunpack.c.l.s4 1983009808
    %v614 = vunpack.c.0.s8 %v613
    %v615 = vlaneseq
    %v616 = vshrl.u32 %v615, 7
    %v617 = vsub.s32 %v614, %v616
    %v618 = vrot.slane %v590, %v617
    %v619 = vcombine.low %v597, %v611
    %v620 = vcombine.high %v597, %v611
    %v621 = vcombine.low %v604, %v618
    %v622 = vcombine.high %v604, %v618
    %v623 = vcombine.low %v99, %v107
    %v624 = vcombine.high %v99, %v107
    %v625 = vcombine.low %v115, %v123
    %v626 = vcombine.high %v115, %v123
    %v628 = vunpack.c.l.s4 1983009808
    %v629 = vunpack.c.0.s8 %v628
    %v630 = vlaneseq
    %v631 = vshrl.u32 %v630, 7
    %v632 = vsub.s32 %v629, %v631
    %v633 = vrot.slane %v623, %v632
    %v635 = vunpack.c.l.s4 1983009808
    %v636 = vunpack.c.0.s8 %v635
    %v637 = vlaneseq
    %v638 = vshrl.u32 %v637, 7
    %v639 = vsub.s32 %v636, %v638
    %v640 = vrot.slane %v624, %v639
    %v642 = vunpack.c.l.s4 1983009808
    %v643 = vunpack.c.0.s8 %v642
    %v644 = vlaneseq
    %v645 = vshrl.u32 %v644, 7
    %v646 = vsub.s32 %v643, %v645
    %v647 = vrot.slane %v625, %v646
    %v649 = vunpack.c.l.s4 1983009808
    %v650 = vunpack.c.0.s8 %v649
    %v651 = vlaneseq
    %v652 = vshrl.u32 %v651, 7
    %v653 = vsub.s32 %v650, %v652
    %v654 = vrot.slane %v626, %v653
    %v655 = vcombine.low %v633, %v647
    %v656 = vcombine.high %v633, %v647
    %v657 = vcombine.low %v640, %v654
    %v658 = vcombine.high %v640, %v654
    %v659 = vcombine.low %v100, %v108
    %v660 = vcombine.high %v100, %v108
    %v661 = vcombine.low %v116, %v124
    %v662 = vcombine.high %v116, %v124
    %v664 = vunpack.c.l.s4 1983009808
    %v665 = vunpack.c.0.s8 %v664
    %v666 = vlaneseq
    %v667 = vshrl.u32 %v666, 7
    %v668 = vsub.s32 %v665, %v667
    %v669 = vrot.slane %v659, %v668
    %v671 = vunpack.c.l.s4 1983009808
    %v672 = vunpack.c.0.s8 %v671
    %v673 = vlaneseq
    %v674 = vshrl.u32 %v673, 7
    %v675 = vsub.s32 %v672, %v674
    %v676 = vrot.slane %v660, %v675
    %v678 = vunpack.c.l.s4 1983009808
    %v679 = vunpack.c.0.s8 %v678
    %v680 = vlaneseq
    %v681 = vshrl.u32 %v680, 7
    %v682 = vsub.s32 %v679, %v681
    %v683 = vrot.slane %v661, %v682
    %v685 = vunpack.c.l.s4 1983009808
    %v686 = vunpack.c.0.s8 %v685
    %v687 = vlaneseq
    %v688 = vshrl.u32 %v687, 7
    %v689 = vsub.s32 %v686, %v688
    %v690 = vrot.slane %v662, %v689
    %v691 = vcombine.low %v669, %v683
    %v692 = vcombine.high %v669, %v683
    %v693 = vcombine.low %v676, %v690
    %v694 = vcombine.high %v676, %v690
    %v695 = vcombine.low %v101, %v109
    %v696 = vcombine.high %v101, %v109
    %v697 = vcombine.low %v117, %v125
    %v698 = vcombine.high %v117, %v125
    %v700 = vunpack.c.l.s4 1983009808
    %v701 = vunpack.c.0.s8 %v700
    %v702 = vlaneseq
    %v703 = vshrl.u32 %v702, 7
    %v704 = vsub.s32 %v701, %v703
    %v705 = vrot.slane %v695, %v704
    %v707 = vunpack.c.l.s4 1983009808
    %v708 = vunpack.c.0.s8 %v707
    %v709 = vlaneseq
    %v710 = vshrl.u32 %v709, 7
    %v711 = vsub.s32 %v708, %v710
    %v712 = vrot.slane %v696, %v711
    %v714 = vunpack.c.l.s4 1983009808
    %v715 = vunpack.c.0.s8 %v714
    %v716 = vlaneseq
    %v717 = vshrl.u32 %v716, 7
    %v718 = vsub.s32 %v715, %v717
    %v719 = vrot.slane %v697, %v718
    %v721 = vunpack.c.l.s4 1983009808
    %v722 = vunpack.c.0.s8 %v721
    %v723 = vlaneseq
    %v724 = vshrl.u32 %v723, 7
    %v725 = vsub.s32 %v722, %v724
    %v726 = vrot.slane %v698, %v725
    %v727 = vcombine.low %v705, %v719
    %v728 = vcombine.high %v705, %v719
    %v729 = vcombine.low %v712, %v726
    %v730 = vcombine.high %v712, %v726
    %v731 = vcombine.low %v102, %v110
    %v732 = vcombine.high %v102, %v110
    %v733 = vcombine.low %v118, %v126
    %v734 = vcombine.high %v118, %v126
    %v736 = vunpack.c.l.s4 1983009808
    %v737 = vunpack.c.0.s8 %v736
    %v738 = vlaneseq
    %v739 = vshrl.u32 %v738, 7
    %v740 = vsub.s32 %v737, %v739
    %v741 = vrot.slane %v731, %v740
    %v743 = vunpack.c.l.s4 1983009808
    %v744 = vunpack.c.0.s8 %v743
    %v745 = vlaneseq
    %v746 = vshrl.u32 %v745, 7
    %v747 = vsub.s32 %v744, %v746
    %v748 = vrot.slane %v732, %v747
    %v750 = vunpack.c.l.s4 1983009808
    %v751 = vunpack.c.0.s8 %v750
    %v752 = vlaneseq
    %v753 = vshrl.u32 %v752, 7
    %v754 = vsub.s32 %v751, %v753
    %v755 = vrot.slane %v733, %v754
    %v757 = vunpack.c.l.s4 1983009808
    %v758 = vunpack.c.0.s8 %v757
    %v759 = vlaneseq
    %v760 = vshrl.u32 %v759, 7
    %v761 = vsub.s32 %v758, %v760
    %v762 = vrot.slane %v734, %v761
    %v763 = vcombine.low %v741, %v755
    %v764 = vcombine.high %v741, %v755
    %v765 = vcombine.low %v748, %v762
    %v766 = vcombine.high %v748, %v762
    %v831 = vpack.c.bf16 %v511, %v223
    %v832 = vpack.c.bf16 %v512, %v224
    %v833 = vpack.c.bf16 %v513, %v225
    %v834 = vpack.c.bf16 %v514, %v226
    %v835 = vpack.c.bf16 %v547, %v259
    %v836 = vpack.c.bf16 %v548, %v260
    %v837 = vpack.c.bf16 %v549, %v261
    %v838 = vpack.c.bf16 %v550, %v262
    %v839 = vpack.c.bf16 %v583, %v295
    %v840 = vpack.c.bf16 %v584, %v296
    %v841 = vpack.c.bf16 %v585, %v297
    %v842 = vpack.c.bf16 %v586, %v298
    %v843 = vpack.c.bf16 %v619, %v331
    %v844 = vpack.c.bf16 %v620, %v332
    %v845 = vpack.c.bf16 %v621, %v333
    %v846 = vpack.c.bf16 %v622, %v334
    %v847 = vpack.c.bf16 %v655, %v367
    %v848 = vpack.c.bf16 %v656, %v368
    %v849 = vpack.c.bf16 %v657, %v369
    %v850 = vpack.c.bf16 %v658, %v370
    %v851 = vpack.c.bf16 %v691, %v403
    %v852 = vpack.c.bf16 %v692, %v404
    %v853 = vpack.c.bf16 %v693, %v405
    %v854 = vpack.c.bf16 %v694, %v406
    %v855 = vpack.c.bf16 %v727, %v439
    %v856 = vpack.c.bf16 %v728, %v440
    %v857 = vpack.c.bf16 %v729, %v441
    %v858 = vpack.c.bf16 %v730, %v442
    %v859 = vpack.c.bf16 %v763, %v475
    %v860 = vpack.c.bf16 %v764, %v476
    %v861 = vpack.c.bf16 %v765, %v477
    %v862 = vpack.c.bf16 %v766, %v478
    %v863 = vld [vmem:[#allocation5] sm:$0xf]
    %v864 = vld [vmem:[#allocation5 + $0x4] sm:$0xf]
    %v865 = vld [vmem:[#allocation5 + $0x8] sm:$0xf]
    %v866 = vld [vmem:[#allocation5 + $0xc] sm:$0xf]
    %v867 = vld [vmem:[#allocation5 + $0x10] sm:$0xf]
    %v868 = vld [vmem:[#allocation5 + $0x14] sm:$0xf]
    %v869 = vld [vmem:[#allocation5 + $0x18] sm:$0xf]
    %v870 = vld [vmem:[#allocation5 + $0x1c] sm:$0xf]
    %v871 = vld [vmem:[#allocation5 + $0x20] sm:$0xf]
    %v872 = vld [vmem:[#allocation5 + $0x24] sm:$0xf]
    %v873 = vld [vmem:[#allocation5 + $0x28] sm:$0xf]
    %v874 = vld [vmem:[#allocation5 + $0x2c] sm:$0xf]
    %v875 = vld [vmem:[#allocation5 + $0x30] sm:$0xf]
    %v876 = vld [vmem:[#allocation5 + $0x34] sm:$0xf]
    %v877 = vld [vmem:[#allocation5 + $0x38] sm:$0xf]
    %v878 = vld [vmem:[#allocation5 + $0x3c] sm:$0xf]
    %v879 = vld [vmem:[#allocation5 + $0x40] sm:$0xf]
    %v880 = vld [vmem:[#allocation5 + $0x44] sm:$0xf]
    %v881 = vld [vmem:[#allocation5 + $0x48] sm:$0xf]
    %v882 = vld [vmem:[#allocation5 + $0x4c] sm:$0xf]
    %v883 = vld [vmem:[#allocation5 + $0x50] sm:$0xf]
    %v884 = vld [vmem:[#allocation5 + $0x54] sm:$0xf]
    %v885 = vld [vmem:[#allocation5 + $0x58] sm:$0xf]
    %v886 = vld [vmem:[#allocation5 + $0x5c] sm:$0xf]
    %v887 = vld [vmem:[#allocation5 + $0x60] sm:$0xf]
    %v888 = vld [vmem:[#allocation5 + $0x64] sm:$0xf]
    %v889 = vld [vmem:[#allocation5 + $0x68] sm:$0xf]
    %v890 = vld [vmem:[#allocation5 + $0x6c] sm:$0xf]
    %v891 = vld [vmem:[#allocation5 + $0x70] sm:$0xf]
    %v892 = vld [vmem:[#allocation5 + $0x74] sm:$0xf]
    %v893 = vld [vmem:[#allocation5 + $0x78] sm:$0xf]
    %v894 = vld [vmem:[#allocation5 + $0x7c] sm:$0xf]
    %v895 = vld [vmem:[#allocation5 + $0x80] sm:$0xf]
    %v896 = vld [vmem:[#allocation5 + $0x84] sm:$0xf]
    %v897 = vld [vmem:[#allocation5 + $0x88] sm:$0xf]
    %v898 = vld [vmem:[#allocation5 + $0x8c] sm:$0xf]
    %v899 = vld [vmem:[#allocation5 + $0x90] sm:$0xf]
    %v900 = vld [vmem:[#allocation5 + $0x94] sm:$0xf]
    %v901 = vld [vmem:[#allocation5 + $0x98] sm:$0xf]
    %v902 = vld [vmem:[#allocation5 + $0x9c] sm:$0xf]
    %v903 = vld [vmem:[#allocation5 + $0xa0] sm:$0xf]
    %v904 = vld [vmem:[#allocation5 + $0xa4] sm:$0xf]
    %v905 = vld [vmem:[#allocation5 + $0xa8] sm:$0xf]
    %v906 = vld [vmem:[#allocation5 + $0xac] sm:$0xf]
    %v907 = vld [vmem:[#allocation5 + $0xb0] sm:$0xf]
    %v908 = vld [vmem:[#allocation5 + $0xb4] sm:$0xf]
    %v909 = vld [vmem:[#allocation5 + $0xb8] sm:$0xf]
    %v910 = vld [vmem:[#allocation5 + $0xbc] sm:$0xf]
    %v911 = vld [vmem:[#allocation5 + $0xc0] sm:$0xf]
    %v912 = vld [vmem:[#allocation5 + $0xc4] sm:$0xf]
    %v913 = vld [vmem:[#allocation5 + $0xc8] sm:$0xf]
    %v914 = vld [vmem:[#allocation5 + $0xcc] sm:$0xf]
    %v915 = vld [vmem:[#allocation5 + $0xd0] sm:$0xf]
    %v916 = vld [vmem:[#allocation5 + $0xd4] sm:$0xf]
    %v917 = vld [vmem:[#allocation5 + $0xd8] sm:$0xf]
    %v918 = vld [vmem:[#allocation5 + $0xdc] sm:$0xf]
    %v919 = vld [vmem:[#allocation5 + $0xe0] sm:$0xf]
    %v920 = vld [vmem:[#allocation5 + $0xe4] sm:$0xf]
    %v921 = vld [vmem:[#allocation5 + $0xe8] sm:$0xf]
    %v922 = vld [vmem:[#allocation5 + $0xec] sm:$0xf]
    %v923 = vld [vmem:[#allocation5 + $0xf0] sm:$0xf]
    %v924 = vld [vmem:[#allocation5 + $0xf4] sm:$0xf]
    %v925 = vld [vmem:[#allocation5 + $0xf8] sm:$0xf]
    %v926 = vld [vmem:[#allocation5 + $0xfc] sm:$0xf]
    %v927 = vld [vmem:[#allocation5 + $0x100] sm:$0xf]
    %v928 = vld [vmem:[#allocation5 + $0x104] sm:$0xf]
    %v929 = vld [vmem:[#allocation5 + $0x108] sm:$0xf]
    %v930 = vld [vmem:[#allocation5 + $0x10c] sm:$0xf]
    %v931 = vld [vmem:[#allocation5 + $0x110] sm:$0xf]
    %v932 = vld [vmem:[#allocation5 + $0x114] sm:$0xf]
    %v933 = vld [vmem:[#allocation5 + $0x118] sm:$0xf]
    %v934 = vld [vmem:[#allocation5 + $0x11c] sm:$0xf]
    %v935 = vld [vmem:[#allocation5 + $0x120] sm:$0xf]
    %v936 = vld [vmem:[#allocation5 + $0x124] sm:$0xf]
    %v937 = vld [vmem:[#allocation5 + $0x128] sm:$0xf]
    %v938 = vld [vmem:[#allocation5 + $0x12c] sm:$0xf]
    %v939 = vld [vmem:[#allocation5 + $0x130] sm:$0xf]
    %v940 = vld [vmem:[#allocation5 + $0x134] sm:$0xf]
    %v941 = vld [vmem:[#allocation5 + $0x138] sm:$0xf]
    %v942 = vld [vmem:[#allocation5 + $0x13c] sm:$0xf]
    %v943 = vld [vmem:[#allocation5 + $0x140] sm:$0xf]
    %v944 = vld [vmem:[#allocation5 + $0x144] sm:$0xf]
    %v945 = vld [vmem:[#allocation5 + $0x148] sm:$0xf]
    %v946 = vld [vmem:[#allocation5 + $0x14c] sm:$0xf]
    %v947 = vld [vmem:[#allocation5 + $0x150] sm:$0xf]
    %v948 = vld [vmem:[#allocation5 + $0x154] sm:$0xf]
    %v949 = vld [vmem:[#allocation5 + $0x158] sm:$0xf]
    %v950 = vld [vmem:[#allocation5 + $0x15c] sm:$0xf]
    %v951 = vld [vmem:[#allocation5 + $0x160] sm:$0xf]
    %v952 = vld [vmem:[#allocation5 + $0x164] sm:$0xf]
    %v953 = vld [vmem:[#allocation5 + $0x168] sm:$0xf]
    %v954 = vld [vmem:[#allocation5 + $0x16c] sm:$0xf]
    %v955 = vld [vmem:[#allocation5 + $0x170] sm:$0xf]
    %v956 = vld [vmem:[#allocation5 + $0x174] sm:$0xf]
    %v957 = vld [vmem:[#allocation5 + $0x178] sm:$0xf]
    %v958 = vld [vmem:[#allocation5 + $0x17c] sm:$0xf]
    %v959 = vld [vmem:[#allocation5 + $0x180] sm:$0xf]
    %v960 = vld [vmem:[#allocation5 + $0x184] sm:$0xf]
    %v961 = vld [vmem:[#allocation5 + $0x188] sm:$0xf]
    %v962 = vld [vmem:[#allocation5 + $0x18c] sm:$0xf]
    %v963 = vld [vmem:[#allocation5 + $0x190] sm:$0xf]
    %v964 = vld [vmem:[#allocation5 + $0x194] sm:$0xf]
    %v965 = vld [vmem:[#allocation5 + $0x198] sm:$0xf]
    %v966 = vld [vmem:[#allocation5 + $0x19c] sm:$0xf]
    %v967 = vld [vmem:[#allocation5 + $0x1a0] sm:$0xf]
    %v968 = vld [vmem:[#allocation5 + $0x1a4] sm:$0xf]
    %v969 = vld [vmem:[#allocation5 + $0x1a8] sm:$0xf]
    %v970 = vld [vmem:[#allocation5 + $0x1ac] sm:$0xf]
    %v971 = vld [vmem:[#allocation5 + $0x1b0] sm:$0xf]
    %v972 = vld [vmem:[#allocation5 + $0x1b4] sm:$0xf]
    %v973 = vld [vmem:[#allocation5 + $0x1b8] sm:$0xf]
    %v974 = vld [vmem:[#allocation5 + $0x1bc] sm:$0xf]
    %v975 = vld [vmem:[#allocation5 + $0x1c0] sm:$0xf]
    %v976 = vld [vmem:[#allocation5 + $0x1c4] sm:$0xf]
    %v977 = vld [vmem:[#allocation5 + $0x1c8] sm:$0xf]
    %v978 = vld [vmem:[#allocation5 + $0x1cc] sm:$0xf]
    %v979 = vld [vmem:[#allocation5 + $0x1d0] sm:$0xf]
    %v980 = vld [vmem:[#allocation5 + $0x1d4] sm:$0xf]
    %v981 = vld [vmem:[#allocation5 + $0x1d8] sm:$0xf]
    %v982 = vld [vmem:[#allocation5 + $0x1dc] sm:$0xf]
    %v983 = vld [vmem:[#allocation5 + $0x1e0] sm:$0xf]
    %v984 = vld [vmem:[#allocation5 + $0x1e4] sm:$0xf]
    %v985 = vld [vmem:[#allocation5 + $0x1e8] sm:$0xf]
    %v986 = vld [vmem:[#allocation5 + $0x1ec] sm:$0xf]
    %v987 = vld [vmem:[#allocation5 + $0x1f0] sm:$0xf]
    %v988 = vld [vmem:[#allocation5 + $0x1f4] sm:$0xf]
    %v989 = vld [vmem:[#allocation5 + $0x1f8] sm:$0xf]
    %v990 = vld [vmem:[#allocation5 + $0x1fc] sm:$0xf]
    %v991 = vld [vmem:[#allocation5 + $0x200] sm:$0xf]
    %v992 = vld [vmem:[#allocation5 + $0x204] sm:$0xf]
    %v993 = vld [vmem:[#allocation5 + $0x208] sm:$0xf]
    %v994 = vld [vmem:[#allocation5 + $0x20c] sm:$0xf]
    %v995 = vld [vmem:[#allocation5 + $0x210] sm:$0xf]
    %v996 = vld [vmem:[#allocation5 + $0x214] sm:$0xf]
    %v997 = vld [vmem:[#allocation5 + $0x218] sm:$0xf]
    %v998 = vld [vmem:[#allocation5 + $0x21c] sm:$0xf]
    %v999 = vld [vmem:[#allocation5 + $0x220] sm:$0xf]
    %v1000 = vld [vmem:[#allocation5 + $0x224] sm:$0xf]
    %v1001 = vld [vmem:[#allocation5 + $0x228] sm:$0xf]
    %v1002 = vld [vmem:[#allocation5 + $0x22c] sm:$0xf]
    %v1003 = vld [vmem:[#allocation5 + $0x230] sm:$0xf]
    %v1004 = vld [vmem:[#allocation5 + $0x234] sm:$0xf]
    %v1005 = vld [vmem:[#allocation5 + $0x238] sm:$0xf]
    %v1006 = vld [vmem:[#allocation5 + $0x23c] sm:$0xf]
    %v1007 = vld [vmem:[#allocation5 + $0x240] sm:$0xf]
    %v1008 = vld [vmem:[#allocation5 + $0x244] sm:$0xf]
    %v1009 = vld [vmem:[#allocation5 + $0x248] sm:$0xf]
    %v1010 = vld [vmem:[#allocation5 + $0x24c] sm:$0xf]
    %v1011 = vld [vmem:[#allocation5 + $0x250] sm:$0xf]
    %v1012 = vld [vmem:[#allocation5 + $0x254] sm:$0xf]
    %v1013 = vld [vmem:[#allocation5 + $0x258] sm:$0xf]
    %v1014 = vld [vmem:[#allocation5 + $0x25c] sm:$0xf]
    %v1015 = vld [vmem:[#allocation5 + $0x260] sm:$0xf]
    %v1016 = vld [vmem:[#allocation5 + $0x264] sm:$0xf]
    %v1017 = vld [vmem:[#allocation5 + $0x268] sm:$0xf]
    %v1018 = vld [vmem:[#allocation5 + $0x26c] sm:$0xf]
    %v1019 = vld [vmem:[#allocation5 + $0x270] sm:$0xf]
    %v1020 = vld [vmem:[#allocation5 + $0x274] sm:$0xf]
    %v1021 = vld [vmem:[#allocation5 + $0x278] sm:$0xf]
    %v1022 = vld [vmem:[#allocation5 + $0x27c] sm:$0xf]
    %v1023 = vld [vmem:[#allocation5 + $0x280] sm:$0xf]
    %v1024 = vld [vmem:[#allocation5 + $0x284] sm:$0xf]
    %v1025 = vld [vmem:[#allocation5 + $0x288] sm:$0xf]
    %v1026 = vld [vmem:[#allocation5 + $0x28c] sm:$0xf]
    %v1027 = vld [vmem:[#allocation5 + $0x290] sm:$0xf]
    %v1028 = vld [vmem:[#allocation5 + $0x294] sm:$0xf]
    %v1029 = vld [vmem:[#allocation5 + $0x298] sm:$0xf]
    %v1030 = vld [vmem:[#allocation5 + $0x29c] sm:$0xf]
    %v1031 = vld [vmem:[#allocation5 + $0x2a0] sm:$0xf]
    %v1032 = vld [vmem:[#allocation5 + $0x2a4] sm:$0xf]
    %v1033 = vld [vmem:[#allocation5 + $0x2a8] sm:$0xf]
    %v1034 = vld [vmem:[#allocation5 + $0x2ac] sm:$0xf]
    %v1035 = vld [vmem:[#allocation5 + $0x2b0] sm:$0xf]
    %v1036 = vld [vmem:[#allocation5 + $0x2b4] sm:$0xf]
    %v1037 = vld [vmem:[#allocation5 + $0x2b8] sm:$0xf]
    %v1038 = vld [vmem:[#allocation5 + $0x2bc] sm:$0xf]
    %v1039 = vld [vmem:[#allocation5 + $0x2c0] sm:$0xf]
    %v1040 = vld [vmem:[#allocation5 + $0x2c4] sm:$0xf]
    %v1041 = vld [vmem:[#allocation5 + $0x2c8] sm:$0xf]
    %v1042 = vld [vmem:[#allocation5 + $0x2cc] sm:$0xf]
    %v1043 = vld [vmem:[#allocation5 + $0x2d0] sm:$0xf]
    %v1044 = vld [vmem:[#allocation5 + $0x2d4] sm:$0xf]
    %v1045 = vld [vmem:[#allocation5 + $0x2d8] sm:$0xf]
    %v1046 = vld [vmem:[#allocation5 + $0x2dc] sm:$0xf]
    %v1047 = vld [vmem:[#allocation5 + $0x2e0] sm:$0xf]
    %v1048 = vld [vmem:[#allocation5 + $0x2e4] sm:$0xf]
    %v1049 = vld [vmem:[#allocation5 + $0x2e8] sm:$0xf]
    %v1050 = vld [vmem:[#allocation5 + $0x2ec] sm:$0xf]
    %v1051 = vld [vmem:[#allocation5 + $0x2f0] sm:$0xf]
    %v1052 = vld [vmem:[#allocation5 + $0x2f4] sm:$0xf]
    %v1053 = vld [vmem:[#allocation5 + $0x2f8] sm:$0xf]
    %v1054 = vld [vmem:[#allocation5 + $0x2fc] sm:$0xf]
    %v1055 = vld [vmem:[#allocation5 + $0x300] sm:$0xf]
    %v1056 = vld [vmem:[#allocation5 + $0x304] sm:$0xf]
    %v1057 = vld [vmem:[#allocation5 + $0x308] sm:$0xf]
    %v1058 = vld [vmem:[#allocation5 + $0x30c] sm:$0xf]
    %v1059 = vld [vmem:[#allocation5 + $0x310] sm:$0xf]
    %v1060 = vld [vmem:[#allocation5 + $0x314] sm:$0xf]
    %v1061 = vld [vmem:[#allocation5 + $0x318] sm:$0xf]
    %v1062 = vld [vmem:[#allocation5 + $0x31c] sm:$0xf]
    %v1063 = vld [vmem:[#allocation5 + $0x320] sm:$0xf]
    %v1064 = vld [vmem:[#allocation5 + $0x324] sm:$0xf]
    %v1065 = vld [vmem:[#allocation5 + $0x328] sm:$0xf]
    %v1066 = vld [vmem:[#allocation5 + $0x32c] sm:$0xf]
    %v1067 = vld [vmem:[#allocation5 + $0x330] sm:$0xf]
    %v1068 = vld [vmem:[#allocation5 + $0x334] sm:$0xf]
    %v1069 = vld [vmem:[#allocation5 + $0x338] sm:$0xf]
    %v1070 = vld [vmem:[#allocation5 + $0x33c] sm:$0xf]
    %v1071 = vld [vmem:[#allocation5 + $0x340] sm:$0xf]
    %v1072 = vld [vmem:[#allocation5 + $0x344] sm:$0xf]
    %v1073 = vld [vmem:[#allocation5 + $0x348] sm:$0xf]
    %v1074 = vld [vmem:[#allocation5 + $0x34c] sm:$0xf]
    %v1075 = vld [vmem:[#allocation5 + $0x350] sm:$0xf]
    %v1076 = vld [vmem:[#allocation5 + $0x354] sm:$0xf]
    %v1077 = vld [vmem:[#allocation5 + $0x358] sm:$0xf]
    %v1078 = vld [vmem:[#allocation5 + $0x35c] sm:$0xf]
    %v1079 = vld [vmem:[#allocation5 + $0x360] sm:$0xf]
    %v1080 = vld [vmem:[#allocation5 + $0x364] sm:$0xf]
    %v1081 = vld [vmem:[#allocation5 + $0x368] sm:$0xf]
    %v1082 = vld [vmem:[#allocation5 + $0x36c] sm:$0xf]
    %v1083 = vld [vmem:[#allocation5 + $0x370] sm:$0xf]
    %v1084 = vld [vmem:[#allocation5 + $0x374] sm:$0xf]
    %v1085 = vld [vmem:[#allocation5 + $0x378] sm:$0xf]
    %v1086 = vld [vmem:[#allocation5 + $0x37c] sm:$0xf]
    %v1087 = vld [vmem:[#allocation5 + $0x380] sm:$0xf]
    %v1088 = vld [vmem:[#allocation5 + $0x384] sm:$0xf]
    %v1089 = vld [vmem:[#allocation5 + $0x388] sm:$0xf]
    %v1090 = vld [vmem:[#allocation5 + $0x38c] sm:$0xf]
    %v1091 = vld [vmem:[#allocation5 + $0x390] sm:$0xf]
    %v1092 = vld [vmem:[#allocation5 + $0x394] sm:$0xf]
    %v1093 = vld [vmem:[#allocation5 + $0x398] sm:$0xf]
    %v1094 = vld [vmem:[#allocation5 + $0x39c] sm:$0xf]
    %v1095 = vld [vmem:[#allocation5 + $0x3a0] sm:$0xf]
    %v1096 = vld [vmem:[#allocation5 + $0x3a4] sm:$0xf]
    %v1097 = vld [vmem:[#allocation5 + $0x3a8] sm:$0xf]
    %v1098 = vld [vmem:[#allocation5 + $0x3ac] sm:$0xf]
    %v1099 = vld [vmem:[#allocation5 + $0x3b0] sm:$0xf]
    %v1100 = vld [vmem:[#allocation5 + $0x3b4] sm:$0xf]
    %v1101 = vld [vmem:[#allocation5 + $0x3b8] sm:$0xf]
    %v1102 = vld [vmem:[#allocation5 + $0x3bc] sm:$0xf]
    %v1103 = vld [vmem:[#allocation5 + $0x3c0] sm:$0xf]
    %v1104 = vld [vmem:[#allocation5 + $0x3c4] sm:$0xf]
    %v1105 = vld [vmem:[#allocation5 + $0x3c8] sm:$0xf]
    %v1106 = vld [vmem:[#allocation5 + $0x3cc] sm:$0xf]
    %v1107 = vld [vmem:[#allocation5 + $0x3d0] sm:$0xf]
    %v1108 = vld [vmem:[#allocation5 + $0x3d4] sm:$0xf]
    %v1109 = vld [vmem:[#allocation5 + $0x3d8] sm:$0xf]
    %v1110 = vld [vmem:[#allocation5 + $0x3dc] sm:$0xf]
    %v1111 = vld [vmem:[#allocation5 + $0x3e0] sm:$0xf]
    %v1112 = vld [vmem:[#allocation5 + $0x3e4] sm:$0xf]
    %v1113 = vld [vmem:[#allocation5 + $0x3e8] sm:$0xf]
    %v1114 = vld [vmem:[#allocation5 + $0x3ec] sm:$0xf]
    %v1115 = vld [vmem:[#allocation5 + $0x3f0] sm:$0xf]
    %v1116 = vld [vmem:[#allocation5 + $0x3f4] sm:$0xf]
    %v1117 = vld [vmem:[#allocation5 + $0x3f8] sm:$0xf]
    %v1118 = vld [vmem:[#allocation5 + $0x3fc] sm:$0xf]
    %v1119 = vld [vmem:[#allocation5 + $0x400] sm:$0xf]
    %v1120 = vld [vmem:[#allocation5 + $0x404] sm:$0xf]
    %v1121 = vld [vmem:[#allocation5 + $0x408] sm:$0xf]
    %v1122 = vld [vmem:[#allocation5 + $0x40c] sm:$0xf]
    %v1123 = vld [vmem:[#allocation5 + $0x410] sm:$0xf]
    %v1124 = vld [vmem:[#allocation5 + $0x414] sm:$0xf]
    %v1125 = vld [vmem:[#allocation5 + $0x418] sm:$0xf]
    %v1126 = vld [vmem:[#allocation5 + $0x41c] sm:$0xf]
    %v1127 = vld [vmem:[#allocation5 + $0x420] sm:$0xf]
    %v1128 = vld [vmem:[#allocation5 + $0x424] sm:$0xf]
    %v1129 = vld [vmem:[#allocation5 + $0x428] sm:$0xf]
    %v1130 = vld [vmem:[#allocation5 + $0x42c] sm:$0xf]
    %v1131 = vld [vmem:[#allocation5 + $0x430] sm:$0xf]
    %v1132 = vld [vmem:[#allocation5 + $0x434] sm:$0xf]
    %v1133 = vld [vmem:[#allocation5 + $0x438] sm:$0xf]
    %v1134 = vld [vmem:[#allocation5 + $0x43c] sm:$0xf]
    %v1135 = vld [vmem:[#allocation5 + $0x440] sm:$0xf]
    %v1136 = vld [vmem:[#allocation5 + $0x444] sm:$0xf]
    %v1137 = vld [vmem:[#allocation5 + $0x448] sm:$0xf]
    %v1138 = vld [vmem:[#allocation5 + $0x44c] sm:$0xf]
    %v1139 = vld [vmem:[#allocation5 + $0x450] sm:$0xf]
    %v1140 = vld [vmem:[#allocation5 + $0x454] sm:$0xf]
    %v1141 = vld [vmem:[#allocation5 + $0x458] sm:$0xf]
    %v1142 = vld [vmem:[#allocation5 + $0x45c] sm:$0xf]
    %v1143 = vld [vmem:[#allocation5 + $0x460] sm:$0xf]
    %v1144 = vld [vmem:[#allocation5 + $0x464] sm:$0xf]
    %v1145 = vld [vmem:[#allocation5 + $0x468] sm:$0xf]
    %v1146 = vld [vmem:[#allocation5 + $0x46c] sm:$0xf]
    %v1147 = vld [vmem:[#allocation5 + $0x470] sm:$0xf]
    %v1148 = vld [vmem:[#allocation5 + $0x474] sm:$0xf]
    %v1149 = vld [vmem:[#allocation5 + $0x478] sm:$0xf]
    %v1150 = vld [vmem:[#allocation5 + $0x47c] sm:$0xf]
    %v1151 = vld [vmem:[#allocation5 + $0x480] sm:$0xf]
    %v1152 = vld [vmem:[#allocation5 + $0x484] sm:$0xf]
    %v1153 = vld [vmem:[#allocation5 + $0x488] sm:$0xf]
    %v1154 = vld [vmem:[#allocation5 + $0x48c] sm:$0xf]
    %v1155 = vld [vmem:[#allocation5 + $0x490] sm:$0xf]
    %v1156 = vld [vmem:[#allocation5 + $0x494] sm:$0xf]
    %v1157 = vld [vmem:[#allocation5 + $0x498] sm:$0xf]
    %v1158 = vld [vmem:[#allocation5 + $0x49c] sm:$0xf]
    %v1159 = vld [vmem:[#allocation5 + $0x4a0] sm:$0xf]
    %v1160 = vld [vmem:[#allocation5 + $0x4a4] sm:$0xf]
    %v1161 = vld [vmem:[#allocation5 + $0x4a8] sm:$0xf]
    %v1162 = vld [vmem:[#allocation5 + $0x4ac] sm:$0xf]
    %v1163 = vld [vmem:[#allocation5 + $0x4b0] sm:$0xf]
    %v1164 = vld [vmem:[#allocation5 + $0x4b4] sm:$0xf]
    %v1165 = vld [vmem:[#allocation5 + $0x4b8] sm:$0xf]
    %v1166 = vld [vmem:[#allocation5 + $0x4bc] sm:$0xf]
    %v1167 = vld [vmem:[#allocation5 + $0x4c0] sm:$0xf]
    %v1168 = vld [vmem:[#allocation5 + $0x4c4] sm:$0xf]
    %v1169 = vld [vmem:[#allocation5 + $0x4c8] sm:$0xf]
    %v1170 = vld [vmem:[#allocation5 + $0x4cc] sm:$0xf]
    %v1171 = vld [vmem:[#allocation5 + $0x4d0] sm:$0xf]
    %v1172 = vld [vmem:[#allocation5 + $0x4d4] sm:$0xf]
    %v1173 = vld [vmem:[#allocation5 + $0x4d8] sm:$0xf]
    %v1174 = vld [vmem:[#allocation5 + $0x4dc] sm:$0xf]
    %v1175 = vld [vmem:[#allocation5 + $0x4e0] sm:$0xf]
    %v1176 = vld [vmem:[#allocation5 + $0x4e4] sm:$0xf]
    %v1177 = vld [vmem:[#allocation5 + $0x4e8] sm:$0xf]
    %v1178 = vld [vmem:[#allocation5 + $0x4ec] sm:$0xf]
    %v1179 = vld [vmem:[#allocation5 + $0x4f0] sm:$0xf]
    %v1180 = vld [vmem:[#allocation5 + $0x4f4] sm:$0xf]
    %v1181 = vld [vmem:[#allocation5 + $0x4f8] sm:$0xf]
    %v1182 = vld [vmem:[#allocation5 + $0x4fc] sm:$0xf]
    %v1183 = vld [vmem:[#allocation5 + $0x500] sm:$0xf]
    %v1184 = vld [vmem:[#allocation5 + $0x504] sm:$0xf]
    %v1185 = vld [vmem:[#allocation5 + $0x508] sm:$0xf]
    %v1186 = vld [vmem:[#allocation5 + $0x50c] sm:$0xf]
    %v1187 = vld [vmem:[#allocation5 + $0x510] sm:$0xf]
    %v1188 = vld [vmem:[#allocation5 + $0x514] sm:$0xf]
    %v1189 = vld [vmem:[#allocation5 + $0x518] sm:$0xf]
    %v1190 = vld [vmem:[#allocation5 + $0x51c] sm:$0xf]
    %v1191 = vld [vmem:[#allocation5 + $0x520] sm:$0xf]
    %v1192 = vld [vmem:[#allocation5 + $0x524] sm:$0xf]
    %v1193 = vld [vmem:[#allocation5 + $0x528] sm:$0xf]
    %v1194 = vld [vmem:[#allocation5 + $0x52c] sm:$0xf]
    %v1195 = vld [vmem:[#allocation5 + $0x530] sm:$0xf]
    %v1196 = vld [vmem:[#allocation5 + $0x534] sm:$0xf]
    %v1197 = vld [vmem:[#allocation5 + $0x538] sm:$0xf]
    %v1198 = vld [vmem:[#allocation5 + $0x53c] sm:$0xf]
    %v1199 = vld [vmem:[#allocation5 + $0x540] sm:$0xf]
    %v1200 = vld [vmem:[#allocation5 + $0x544] sm:$0xf]
    %v1201 = vld [vmem:[#allocation5 + $0x548] sm:$0xf]
    %v1202 = vld [vmem:[#allocation5 + $0x54c] sm:$0xf]
    %v1203 = vld [vmem:[#allocation5 + $0x550] sm:$0xf]
    %v1204 = vld [vmem:[#allocation5 + $0x554] sm:$0xf]
    %v1205 = vld [vmem:[#allocation5 + $0x558] sm:$0xf]
    %v1206 = vld [vmem:[#allocation5 + $0x55c] sm:$0xf]
    %v1207 = vld [vmem:[#allocation5 + $0x560] sm:$0xf]
    %v1208 = vld [vmem:[#allocation5 + $0x564] sm:$0xf]
    %v1209 = vld [vmem:[#allocation5 + $0x568] sm:$0xf]
    %v1210 = vld [vmem:[#allocation5 + $0x56c] sm:$0xf]
    %v1211 = vld [vmem:[#allocation5 + $0x570] sm:$0xf]
    %v1212 = vld [vmem:[#allocation5 + $0x574] sm:$0xf]
    %v1213 = vld [vmem:[#allocation5 + $0x578] sm:$0xf]
    %v1214 = vld [vmem:[#allocation5 + $0x57c] sm:$0xf]
    %v1215 = vld [vmem:[#allocation5 + $0x580] sm:$0xf]
    %v1216 = vld [vmem:[#allocation5 + $0x584] sm:$0xf]
    %v1217 = vld [vmem:[#allocation5 + $0x588] sm:$0xf]
    %v1218 = vld [vmem:[#allocation5 + $0x58c] sm:$0xf]
    %v1219 = vld [vmem:[#allocation5 + $0x590] sm:$0xf]
    %v1220 = vld [vmem:[#allocation5 + $0x594] sm:$0xf]
    %v1221 = vld [vmem:[#allocation5 + $0x598] sm:$0xf]
    %v1222 = vld [vmem:[#allocation5 + $0x59c] sm:$0xf]
    %v1223 = vld [vmem:[#allocation5 + $0x5a0] sm:$0xf]
    %v1224 = vld [vmem:[#allocation5 + $0x5a4] sm:$0xf]
    %v1225 = vld [vmem:[#allocation5 + $0x5a8] sm:$0xf]
    %v1226 = vld [vmem:[#allocation5 + $0x5ac] sm:$0xf]
    %v1227 = vld [vmem:[#allocation5 + $0x5b0] sm:$0xf]
    %v1228 = vld [vmem:[#allocation5 + $0x5b4] sm:$0xf]
    %v1229 = vld [vmem:[#allocation5 + $0x5b8] sm:$0xf]
    %v1230 = vld [vmem:[#allocation5 + $0x5bc] sm:$0xf]
    %v1231 = vld [vmem:[#allocation5 + $0x5c0] sm:$0xf]
    %v1232 = vld [vmem:[#allocation5 + $0x5c4] sm:$0xf]
    %v1233 = vld [vmem:[#allocation5 + $0x5c8] sm:$0xf]
    %v1234 = vld [vmem:[#allocation5 + $0x5cc] sm:$0xf]
    %v1235 = vld [vmem:[#allocation5 + $0x5d0] sm:$0xf]
    %v1236 = vld [vmem:[#allocation5 + $0x5d4] sm:$0xf]
    %v1237 = vld [vmem:[#allocation5 + $0x5d8] sm:$0xf]
    %v1238 = vld [vmem:[#allocation5 + $0x5dc] sm:$0xf]
    %v1239 = vld [vmem:[#allocation5 + $0x5e0] sm:$0xf]
    %v1240 = vld [vmem:[#allocation5 + $0x5e4] sm:$0xf]
    %v1241 = vld [vmem:[#allocation5 + $0x5e8] sm:$0xf]
    %v1242 = vld [vmem:[#allocation5 + $0x5ec] sm:$0xf]
    %v1243 = vld [vmem:[#allocation5 + $0x5f0] sm:$0xf]
    %v1244 = vld [vmem:[#allocation5 + $0x5f4] sm:$0xf]
    %v1245 = vld [vmem:[#allocation5 + $0x5f8] sm:$0xf]
    %v1246 = vld [vmem:[#allocation5 + $0x5fc] sm:$0xf]
    %v1247 = vld [vmem:[#allocation5 + $0x600] sm:$0xf]
    %v1248 = vld [vmem:[#allocation5 + $0x604] sm:$0xf]
    %v1249 = vld [vmem:[#allocation5 + $0x608] sm:$0xf]
    %v1250 = vld [vmem:[#allocation5 + $0x60c] sm:$0xf]
    %v1251 = vld [vmem:[#allocation5 + $0x610] sm:$0xf]
    %v1252 = vld [vmem:[#allocation5 + $0x614] sm:$0xf]
    %v1253 = vld [vmem:[#allocation5 + $0x618] sm:$0xf]
    %v1254 = vld [vmem:[#allocation5 + $0x61c] sm:$0xf]
    %v1255 = vld [vmem:[#allocation5 + $0x620] sm:$0xf]
    %v1256 = vld [vmem:[#allocation5 + $0x624] sm:$0xf]
    %v1257 = vld [vmem:[#allocation5 + $0x628] sm:$0xf]
    %v1258 = vld [vmem:[#allocation5 + $0x62c] sm:$0xf]
    %v1259 = vld [vmem:[#allocation5 + $0x630] sm:$0xf]
    %v1260 = vld [vmem:[#allocation5 + $0x634] sm:$0xf]
    %v1261 = vld [vmem:[#allocation5 + $0x638] sm:$0xf]
    %v1262 = vld [vmem:[#allocation5 + $0x63c] sm:$0xf]
    %v1263 = vld [vmem:[#allocation5 + $0x640] sm:$0xf]
    %v1264 = vld [vmem:[#allocation5 + $0x644] sm:$0xf]
    %v1265 = vld [vmem:[#allocation5 + $0x648] sm:$0xf]
    %v1266 = vld [vmem:[#allocation5 + $0x64c] sm:$0xf]
    %v1267 = vld [vmem:[#allocation5 + $0x650] sm:$0xf]
    %v1268 = vld [vmem:[#allocation5 + $0x654] sm:$0xf]
    %v1269 = vld [vmem:[#allocation5 + $0x658] sm:$0xf]
    %v1270 = vld [vmem:[#allocation5 + $0x65c] sm:$0xf]
    %v1271 = vld [vmem:[#allocation5 + $0x660] sm:$0xf]
    %v1272 = vld [vmem:[#allocation5 + $0x664] sm:$0xf]
    %v1273 = vld [vmem:[#allocation5 + $0x668] sm:$0xf]
    %v1274 = vld [vmem:[#allocation5 + $0x66c] sm:$0xf]
    %v1275 = vld [vmem:[#allocation5 + $0x670] sm:$0xf]
    %v1276 = vld [vmem:[#allocation5 + $0x674] sm:$0xf]
    %v1277 = vld [vmem:[#allocation5 + $0x678] sm:$0xf]
    %v1278 = vld [vmem:[#allocation5 + $0x67c] sm:$0xf]
    %v1279 = vld [vmem:[#allocation5 + $0x680] sm:$0xf]
    %v1280 = vld [vmem:[#allocation5 + $0x684] sm:$0xf]
    %v1281 = vld [vmem:[#allocation5 + $0x688] sm:$0xf]
    %v1282 = vld [vmem:[#allocation5 + $0x68c] sm:$0xf]
    %v1283 = vld [vmem:[#allocation5 + $0x690] sm:$0xf]
    %v1284 = vld [vmem:[#allocation5 + $0x694] sm:$0xf]
    %v1285 = vld [vmem:[#allocation5 + $0x698] sm:$0xf]
    %v1286 = vld [vmem:[#allocation5 + $0x69c] sm:$0xf]
    %v1287 = vld [vmem:[#allocation5 + $0x6a0] sm:$0xf]
    %v1288 = vld [vmem:[#allocation5 + $0x6a4] sm:$0xf]
    %v1289 = vld [vmem:[#allocation5 + $0x6a8] sm:$0xf]
    %v1290 = vld [vmem:[#allocation5 + $0x6ac] sm:$0xf]
    %v1291 = vld [vmem:[#allocation5 + $0x6b0] sm:$0xf]
    %v1292 = vld [vmem:[#allocation5 + $0x6b4] sm:$0xf]
    %v1293 = vld [vmem:[#allocation5 + $0x6b8] sm:$0xf]
    %v1294 = vld [vmem:[#allocation5 + $0x6bc] sm:$0xf]
    %v1295 = vld [vmem:[#allocation5 + $0x6c0] sm:$0xf]
    %v1296 = vld [vmem:[#allocation5 + $0x6c4] sm:$0xf]
    %v1297 = vld [vmem:[#allocation5 + $0x6c8] sm:$0xf]
    %v1298 = vld [vmem:[#allocation5 + $0x6cc] sm:$0xf]
    %v1299 = vld [vmem:[#allocation5 + $0x6d0] sm:$0xf]
    %v1300 = vld [vmem:[#allocation5 + $0x6d4] sm:$0xf]
    %v1301 = vld [vmem:[#allocation5 + $0x6d8] sm:$0xf]
    %v1302 = vld [vmem:[#allocation5 + $0x6dc] sm:$0xf]
    %v1303 = vld [vmem:[#allocation5 + $0x6e0] sm:$0xf]
    %v1304 = vld [vmem:[#allocation5 + $0x6e4] sm:$0xf]
    %v1305 = vld [vmem:[#allocation5 + $0x6e8] sm:$0xf]
    %v1306 = vld [vmem:[#allocation5 + $0x6ec] sm:$0xf]
    %v1307 = vld [vmem:[#allocation5 + $0x6f0] sm:$0xf]
    %v1308 = vld [vmem:[#allocation5 + $0x6f4] sm:$0xf]
    %v1309 = vld [vmem:[#allocation5 + $0x6f8] sm:$0xf]
    %v1310 = vld [vmem:[#allocation5 + $0x6fc] sm:$0xf]
    %v1311 = vld [vmem:[#allocation5 + $0x700] sm:$0xf]
    %v1312 = vld [vmem:[#allocation5 + $0x704] sm:$0xf]
    %v1313 = vld [vmem:[#allocation5 + $0x708] sm:$0xf]
    %v1314 = vld [vmem:[#allocation5 + $0x70c] sm:$0xf]
    %v1315 = vld [vmem:[#allocation5 + $0x710] sm:$0xf]
    %v1316 = vld [vmem:[#allocation5 + $0x714] sm:$0xf]
    %v1317 = vld [vmem:[#allocation5 + $0x718] sm:$0xf]
    %v1318 = vld [vmem:[#allocation5 + $0x71c] sm:$0xf]
    %v1319 = vld [vmem:[#allocation5 + $0x720] sm:$0xf]
    %v1320 = vld [vmem:[#allocation5 + $0x724] sm:$0xf]
    %v1321 = vld [vmem:[#allocation5 + $0x728] sm:$0xf]
    %v1322 = vld [vmem:[#allocation5 + $0x72c] sm:$0xf]
    %v1323 = vld [vmem:[#allocation5 + $0x730] sm:$0xf]
    %v1324 = vld [vmem:[#allocation5 + $0x734] sm:$0xf]
    %v1325 = vld [vmem:[#allocation5 + $0x738] sm:$0xf]
    %v1326 = vld [vmem:[#allocation5 + $0x73c] sm:$0xf]
    %v1327 = vld [vmem:[#allocation5 + $0x740] sm:$0xf]
    %v1328 = vld [vmem:[#allocation5 + $0x744] sm:$0xf]
    %v1329 = vld [vmem:[#allocation5 + $0x748] sm:$0xf]
    %v1330 = vld [vmem:[#allocation5 + $0x74c] sm:$0xf]
    %v1331 = vld [vmem:[#allocation5 + $0x750] sm:$0xf]
    %v1332 = vld [vmem:[#allocation5 + $0x754] sm:$0xf]
    %v1333 = vld [vmem:[#allocation5 + $0x758] sm:$0xf]
    %v1334 = vld [vmem:[#allocation5 + $0x75c] sm:$0xf]
    %v1335 = vld [vmem:[#allocation5 + $0x760] sm:$0xf]
    %v1336 = vld [vmem:[#allocation5 + $0x764] sm:$0xf]
    %v1337 = vld [vmem:[#allocation5 + $0x768] sm:$0xf]
    %v1338 = vld [vmem:[#allocation5 + $0x76c] sm:$0xf]
    %v1339 = vld [vmem:[#allocation5 + $0x770] sm:$0xf]
    %v1340 = vld [vmem:[#allocation5 + $0x774] sm:$0xf]
    %v1341 = vld [vmem:[#allocation5 + $0x778] sm:$0xf]
    %v1342 = vld [vmem:[#allocation5 + $0x77c] sm:$0xf]
    %v1343 = vld [vmem:[#allocation5 + $0x780] sm:$0xf]
    %v1344 = vld [vmem:[#allocation5 + $0x784] sm:$0xf]
    %v1345 = vld [vmem:[#allocation5 + $0x788] sm:$0xf]
    %v1346 = vld [vmem:[#allocation5 + $0x78c] sm:$0xf]
    %v1347 = vld [vmem:[#allocation5 + $0x790] sm:$0xf]
    %v1348 = vld [vmem:[#allocation5 + $0x794] sm:$0xf]
    %v1349 = vld [vmem:[#allocation5 + $0x798] sm:$0xf]
    %v1350 = vld [vmem:[#allocation5 + $0x79c] sm:$0xf]
    %v1351 = vld [vmem:[#allocation5 + $0x7a0] sm:$0xf]
    %v1352 = vld [vmem:[#allocation5 + $0x7a4] sm:$0xf]
    %v1353 = vld [vmem:[#allocation5 + $0x7a8] sm:$0xf]
    %v1354 = vld [vmem:[#allocation5 + $0x7ac] sm:$0xf]
    %v1355 = vld [vmem:[#allocation5 + $0x7b0] sm:$0xf]
    %v1356 = vld [vmem:[#allocation5 + $0x7b4] sm:$0xf]
    %v1357 = vld [vmem:[#allocation5 + $0x7b8] sm:$0xf]
    %v1358 = vld [vmem:[#allocation5 + $0x7bc] sm:$0xf]
    %v1359 = vld [vmem:[#allocation5 + $0x7c0] sm:$0xf]
    %v1360 = vld [vmem:[#allocation5 + $0x7c4] sm:$0xf]
    %v1361 = vld [vmem:[#allocation5 + $0x7c8] sm:$0xf]
    %v1362 = vld [vmem:[#allocation5 + $0x7cc] sm:$0xf]
    %v1363 = vld [vmem:[#allocation5 + $0x7d0] sm:$0xf]
    %v1364 = vld [vmem:[#allocation5 + $0x7d4] sm:$0xf]
    %v1365 = vld [vmem:[#allocation5 + $0x7d8] sm:$0xf]
    %v1366 = vld [vmem:[#allocation5 + $0x7dc] sm:$0xf]
    %v1367 = vld [vmem:[#allocation5 + $0x7e0] sm:$0xf]
    %v1368 = vld [vmem:[#allocation5 + $0x7e4] sm:$0xf]
    %v1369 = vld [vmem:[#allocation5 + $0x7e8] sm:$0xf]
    %v1370 = vld [vmem:[#allocation5 + $0x7ec] sm:$0xf]
    %v1371 = vld [vmem:[#allocation5 + $0x7f0] sm:$0xf]
    %v1372 = vld [vmem:[#allocation5 + $0x7f4] sm:$0xf]
    %v1373 = vld [vmem:[#allocation5 + $0x7f8] sm:$0xf]
    %v1374 = vld [vmem:[#allocation5 + $0x7fc] sm:$0xf]
    %v1375 = vld [vmem:[%s2] sm:$0x1]
    %v1377 = vlaneseq
    %v1378 = vshrl.u32 %v1377, 7
    %v1379 = vsub.s32 0, %v1378
    %v1380 = vrot.slane %v1375, %v1379
    %v1894 = vunpack.c.l.b16 %v863
    %v1895 = vunpack.c.l.b16 %v864
    %v1896 = vunpack.c.l.b16 %v865
    %v1897 = vunpack.c.l.b16 %v866
    %v1898 = vunpack.c.l.b16 %v867
    %v1899 = vunpack.c.l.b16 %v868
    %v1900 = vunpack.c.l.b16 %v869
    %v1901 = vunpack.c.l.b16 %v870
    %v1902 = vunpack.c.l.b16 %v871
    %v1903 = vunpack.c.l.b16 %v872
    %v1904 = vunpack.c.l.b16 %v873
    %v1905 = vunpack.c.l.b16 %v874
    %v1906 = vunpack.c.l.b16 %v875
    %v1907 = vunpack.c.l.b16 %v876
    %v1908 = vunpack.c.l.b16 %v877
    %v1909 = vunpack.c.l.b16 %v878
    %v1910 = vunpack.c.l.b16 %v879
    %v1911 = vunpack.c.l.b16 %v880
    %v1912 = vunpack.c.l.b16 %v881
    %v1913 = vunpack.c.l.b16 %v882
    %v1914 = vunpack.c.l.b16 %v883
    %v1915 = vunpack.c.l.b16 %v884
    %v1916 = vunpack.c.l.b16 %v885
    %v1917 = vunpack.c.l.b16 %v886
    %v1918 = vunpack.c.l.b16 %v887
    %v1919 = vunpack.c.l.b16 %v888
    %v1920 = vunpack.c.l.b16 %v889
    %v1921 = vunpack.c.l.b16 %v890
    %v1922 = vunpack.c.l.b16 %v891
    %v1923 = vunpack.c.l.b16 %v892
    %v1924 = vunpack.c.l.b16 %v893
    %v1925 = vunpack.c.l.b16 %v894
    %v1926 = vunpack.c.l.b16 %v895
    %v1927 = vunpack.c.l.b16 %v896
    %v1928 = vunpack.c.l.b16 %v897
    %v1929 = vunpack.c.l.b16 %v898
    %v1930 = vunpack.c.l.b16 %v899
    %v1931 = vunpack.c.l.b16 %v900
    %v1932 = vunpack.c.l.b16 %v901
    %v1933 = vunpack.c.l.b16 %v902
    %v1934 = vunpack.c.l.b16 %v903
    %v1935 = vunpack.c.l.b16 %v904
    %v1936 = vunpack.c.l.b16 %v905
    %v1937 = vunpack.c.l.b16 %v906
    %v1938 = vunpack.c.l.b16 %v907
    %v1939 = vunpack.c.l.b16 %v908
    %v1940 = vunpack.c.l.b16 %v909
    %v1941 = vunpack.c.l.b16 %v910
    %v1942 = vunpack.c.l.b16 %v911
    %v1943 = vunpack.c.l.b16 %v912
    %v1944 = vunpack.c.l.b16 %v913
    %v1945 = vunpack.c.l.b16 %v914
    %v1946 = vunpack.c.l.b16 %v915
    %v1947 = vunpack.c.l.b16 %v916
    %v1948 = vunpack.c.l.b16 %v917
    %v1949 = vunpack.c.l.b16 %v918
    %v1950 = vunpack.c.l.b16 %v919
    %v1951 = vunpack.c.l.b16 %v920
    %v1952 = vunpack.c.l.b16 %v921
    %v1953 = vunpack.c.l.b16 %v922
    %v1954 = vunpack.c.l.b16 %v923
    %v1955 = vunpack.c.l.b16 %v924
    %v1956 = vunpack.c.l.b16 %v925
    %v1957 = vunpack.c.l.b16 %v926
    %v1958 = vunpack.c.l.b16 %v927
    %v1959 = vunpack.c.l.b16 %v928
    %v1960 = vunpack.c.l.b16 %v929
    %v1961 = vunpack.c.l.b16 %v930
    %v1962 = vunpack.c.l.b16 %v931
    %v1963 = vunpack.c.l.b16 %v932
    %v1964 = vunpack.c.l.b16 %v933
    %v1965 = vunpack.c.l.b16 %v934
    %v1966 = vunpack.c.l.b16 %v935
    %v1967 = vunpack.c.l.b16 %v936
    %v1968 = vunpack.c.l.b16 %v937
    %v1969 = vunpack.c.l.b16 %v938
    %v1970 = vunpack.c.l.b16 %v939
    %v1971 = vunpack.c.l.b16 %v940
    %v1972 = vunpack.c.l.b16 %v941
    %v1973 = vunpack.c.l.b16 %v942
    %v1974 = vunpack.c.l.b16 %v943
    %v1975 = vunpack.c.l.b16 %v944
    %v1976 = vunpack.c.l.b16 %v945
    %v1977 = vunpack.c.l.b16 %v946
    %v1978 = vunpack.c.l.b16 %v947
    %v1979 = vunpack.c.l.b16 %v948
    %v1980 = vunpack.c.l.b16 %v949
    %v1981 = vunpack.c.l.b16 %v950
    %v1982 = vunpack.c.l.b16 %v951
    %v1983 = vunpack.c.l.b16 %v952
    %v1984 = vunpack.c.l.b16 %v953
    %v1985 = vunpack.c.l.b16 %v954
    %v1986 = vunpack.c.l.b16 %v955
    %v1987 = vunpack.c.l.b16 %v956
    %v1988 = vunpack.c.l.b16 %v957
    %v1989 = vunpack.c.l.b16 %v958
    %v1990 = vunpack.c.l.b16 %v959
    %v1991 = vunpack.c.l.b16 %v960
    %v1992 = vunpack.c.l.b16 %v961
    %v1993 = vunpack.c.l.b16 %v962
    %v1994 = vunpack.c.l.b16 %v963
    %v1995 = vunpack.c.l.b16 %v964
    %v1996 = vunpack.c.l.b16 %v965
    %v1997 = vunpack.c.l.b16 %v966
    %v1998 = vunpack.c.l.b16 %v967
    %v1999 = vunpack.c.l.b16 %v968
    %v2000 = vunpack.c.l.b16 %v969
    %v2001 = vunpack.c.l.b16 %v970
    %v2002 = vunpack.c.l.b16 %v971
    %v2003 = vunpack.c.l.b16 %v972
    %v2004 = vunpack.c.l.b16 %v973
    %v2005 = vunpack.c.l.b16 %v974
    %v2006 = vunpack.c.l.b16 %v975
    %v2007 = vunpack.c.l.b16 %v976
    %v2008 = vunpack.c.l.b16 %v977
    %v2009 = vunpack.c.l.b16 %v978
    %v2010 = vunpack.c.l.b16 %v979
    %v2011 = vunpack.c.l.b16 %v980
    %v2012 = vunpack.c.l.b16 %v981
    %v2013 = vunpack.c.l.b16 %v982
    %v2014 = vunpack.c.l.b16 %v983
    %v2015 = vunpack.c.l.b16 %v984
    %v2016 = vunpack.c.l.b16 %v985
    %v2017 = vunpack.c.l.b16 %v986
    %v2018 = vunpack.c.l.b16 %v987
    %v2019 = vunpack.c.l.b16 %v988
    %v2020 = vunpack.c.l.b16 %v989
    %v2021 = vunpack.c.l.b16 %v990
    %v2022 = vunpack.c.l.b16 %v991
    %v2023 = vunpack.c.l.b16 %v992
    %v2024 = vunpack.c.l.b16 %v993
    %v2025 = vunpack.c.l.b16 %v994
    %v2026 = vunpack.c.l.b16 %v995
    %v2027 = vunpack.c.l.b16 %v996
    %v2028 = vunpack.c.l.b16 %v997
    %v2029 = vunpack.c.l.b16 %v998
    %v2030 = vunpack.c.l.b16 %v999
    %v2031 = vunpack.c.l.b16 %v1000
    %v2032 = vunpack.c.l.b16 %v1001
    %v2033 = vunpack.c.l.b16 %v1002
    %v2034 = vunpack.c.l.b16 %v1003
    %v2035 = vunpack.c.l.b16 %v1004
    %v2036 = vunpack.c.l.b16 %v1005
    %v2037 = vunpack.c.l.b16 %v1006
    %v2038 = vunpack.c.l.b16 %v1007
    %v2039 = vunpack.c.l.b16 %v1008
    %v2040 = vunpack.c.l.b16 %v1009
    %v2041 = vunpack.c.l.b16 %v1010
    %v2042 = vunpack.c.l.b16 %v1011
    %v2043 = vunpack.c.l.b16 %v1012
    %v2044 = vunpack.c.l.b16 %v1013
    %v2045 = vunpack.c.l.b16 %v1014
    %v2046 = vunpack.c.l.b16 %v1015
    %v2047 = vunpack.c.l.b16 %v1016
    %v2048 = vunpack.c.l.b16 %v1017
    %v2049 = vunpack.c.l.b16 %v1018
    %v2050 = vunpack.c.l.b16 %v1019
    %v2051 = vunpack.c.l.b16 %v1020
    %v2052 = vunpack.c.l.b16 %v1021
    %v2053 = vunpack.c.l.b16 %v1022
    %v2054 = vunpack.c.l.b16 %v1023
    %v2055 = vunpack.c.l.b16 %v1024
    %v2056 = vunpack.c.l.b16 %v1025
    %v2057 = vunpack.c.l.b16 %v1026
    %v2058 = vunpack.c.l.b16 %v1027
    %v2059 = vunpack.c.l.b16 %v1028
    %v2060 = vunpack.c.l.b16 %v1029
    %v2061 = vunpack.c.l.b16 %v1030
    %v2062 = vunpack.c.l.b16 %v1031
    %v2063 = vunpack.c.l.b16 %v1032
    %v2064 = vunpack.c.l.b16 %v1033
    %v2065 = vunpack.c.l.b16 %v1034
    %v2066 = vunpack.c.l.b16 %v1035
    %v2067 = vunpack.c.l.b16 %v1036
    %v2068 = vunpack.c.l.b16 %v1037
    %v2069 = vunpack.c.l.b16 %v1038
    %v2070 = vunpack.c.l.b16 %v1039
    %v2071 = vunpack.c.l.b16 %v1040
    %v2072 = vunpack.c.l.b16 %v1041
    %v2073 = vunpack.c.l.b16 %v1042
    %v2074 = vunpack.c.l.b16 %v1043
    %v2075 = vunpack.c.l.b16 %v1044
    %v2076 = vunpack.c.l.b16 %v1045
    %v2077 = vunpack.c.l.b16 %v1046
    %v2078 = vunpack.c.l.b16 %v1047
    %v2079 = vunpack.c.l.b16 %v1048
    %v2080 = vunpack.c.l.b16 %v1049
    %v2081 = vunpack.c.l.b16 %v1050
    %v2082 = vunpack.c.l.b16 %v1051
    %v2083 = vunpack.c.l.b16 %v1052
    %v2084 = vunpack.c.l.b16 %v1053
    %v2085 = vunpack.c.l.b16 %v1054
    %v2086 = vunpack.c.l.b16 %v1055
    %v2087 = vunpack.c.l.b16 %v1056
    %v2088 = vunpack.c.l.b16 %v1057
    %v2089 = vunpack.c.l.b16 %v1058
    %v2090 = vunpack.c.l.b16 %v1059
    %v2091 = vunpack.c.l.b16 %v1060
    %v2092 = vunpack.c.l.b16 %v1061
    %v2093 = vunpack.c.l.b16 %v1062
    %v2094 = vunpack.c.l.b16 %v1063
    %v2095 = vunpack.c.l.b16 %v1064
    %v2096 = vunpack.c.l.b16 %v1065
    %v2097 = vunpack.c.l.b16 %v1066
    %v2098 = vunpack.c.l.b16 %v1067
    %v2099 = vunpack.c.l.b16 %v1068
    %v2100 = vunpack.c.l.b16 %v1069
    %v2101 = vunpack.c.l.b16 %v1070
    %v2102 = vunpack.c.l.b16 %v1071
    %v2103 = vunpack.c.l.b16 %v1072
    %v2104 = vunpack.c.l.b16 %v1073
    %v2105 = vunpack.c.l.b16 %v1074
    %v2106 = vunpack.c.l.b16 %v1075
    %v2107 = vunpack.c.l.b16 %v1076
    %v2108 = vunpack.c.l.b16 %v1077
    %v2109 = vunpack.c.l.b16 %v1078
    %v2110 = vunpack.c.l.b16 %v1079
    %v2111 = vunpack.c.l.b16 %v1080
    %v2112 = vunpack.c.l.b16 %v1081
    %v2113 = vunpack.c.l.b16 %v1082
    %v2114 = vunpack.c.l.b16 %v1083
    %v2115 = vunpack.c.l.b16 %v1084
    %v2116 = vunpack.c.l.b16 %v1085
    %v2117 = vunpack.c.l.b16 %v1086
    %v2118 = vunpack.c.l.b16 %v1087
    %v2119 = vunpack.c.l.b16 %v1088
    %v2120 = vunpack.c.l.b16 %v1089
    %v2121 = vunpack.c.l.b16 %v1090
    %v2122 = vunpack.c.l.b16 %v1091
    %v2123 = vunpack.c.l.b16 %v1092
    %v2124 = vunpack.c.l.b16 %v1093
    %v2125 = vunpack.c.l.b16 %v1094
    %v2126 = vunpack.c.l.b16 %v1095
    %v2127 = vunpack.c.l.b16 %v1096
    %v2128 = vunpack.c.l.b16 %v1097
    %v2129 = vunpack.c.l.b16 %v1098
    %v2130 = vunpack.c.l.b16 %v1099
    %v2131 = vunpack.c.l.b16 %v1100
    %v2132 = vunpack.c.l.b16 %v1101
    %v2133 = vunpack.c.l.b16 %v1102
    %v2134 = vunpack.c.l.b16 %v1103
    %v2135 = vunpack.c.l.b16 %v1104
    %v2136 = vunpack.c.l.b16 %v1105
    %v2137 = vunpack.c.l.b16 %v1106
    %v2138 = vunpack.c.l.b16 %v1107
    %v2139 = vunpack.c.l.b16 %v1108
    %v2140 = vunpack.c.l.b16 %v1109
    %v2141 = vunpack.c.l.b16 %v1110
    %v2142 = vunpack.c.l.b16 %v1111
    %v2143 = vunpack.c.l.b16 %v1112
    %v2144 = vunpack.c.l.b16 %v1113
    %v2145 = vunpack.c.l.b16 %v1114
    %v2146 = vunpack.c.l.b16 %v1115
    %v2147 = vunpack.c.l.b16 %v1116
    %v2148 = vunpack.c.l.b16 %v1117
    %v2149 = vunpack.c.l.b16 %v1118
    %v2150 = vunpack.c.l.b16 %v1119
    %v2151 = vunpack.c.l.b16 %v1120
    %v2152 = vunpack.c.l.b16 %v1121
    %v2153 = vunpack.c.l.b16 %v1122
    %v2154 = vunpack.c.l.b16 %v1123
    %v2155 = vunpack.c.l.b16 %v1124
    %v2156 = vunpack.c.l.b16 %v1125
    %v2157 = vunpack.c.l.b16 %v1126
    %v2158 = vunpack.c.l.b16 %v1127
    %v2159 = vunpack.c.l.b16 %v1128
    %v2160 = vunpack.c.l.b16 %v1129
    %v2161 = vunpack.c.l.b16 %v1130
    %v2162 = vunpack.c.l.b16 %v1131
    %v2163 = vunpack.c.l.b16 %v1132
    %v2164 = vunpack.c.l.b16 %v1133
    %v2165 = vunpack.c.l.b16 %v1134
    %v2166 = vunpack.c.l.b16 %v1135
    %v2167 = vunpack.c.l.b16 %v1136
    %v2168 = vunpack.c.l.b16 %v1137
    %v2169 = vunpack.c.l.b16 %v1138
    %v2170 = vunpack.c.l.b16 %v1139
    %v2171 = vunpack.c.l.b16 %v1140
    %v2172 = vunpack.c.l.b16 %v1141
    %v2173 = vunpack.c.l.b16 %v1142
    %v2174 = vunpack.c.l.b16 %v1143
    %v2175 = vunpack.c.l.b16 %v1144
    %v2176 = vunpack.c.l.b16 %v1145
    %v2177 = vunpack.c.l.b16 %v1146
    %v2178 = vunpack.c.l.b16 %v1147
    %v2179 = vunpack.c.l.b16 %v1148
    %v2180 = vunpack.c.l.b16 %v1149
    %v2181 = vunpack.c.l.b16 %v1150
    %v2182 = vunpack.c.l.b16 %v1151
    %v2183 = vunpack.c.l.b16 %v1152
    %v2184 = vunpack.c.l.b16 %v1153
    %v2185 = vunpack.c.l.b16 %v1154
    %v2186 = vunpack.c.l.b16 %v1155
    %v2187 = vunpack.c.l.b16 %v1156
    %v2188 = vunpack.c.l.b16 %v1157
    %v2189 = vunpack.c.l.b16 %v1158
    %v2190 = vunpack.c.l.b16 %v1159
    %v2191 = vunpack.c.l.b16 %v1160
    %v2192 = vunpack.c.l.b16 %v1161
    %v2193 = vunpack.c.l.b16 %v1162
    %v2194 = vunpack.c.l.b16 %v1163
    %v2195 = vunpack.c.l.b16 %v1164
    %v2196 = vunpack.c.l.b16 %v1165
    %v2197 = vunpack.c.l.b16 %v1166
    %v2198 = vunpack.c.l.b16 %v1167
    %v2199 = vunpack.c.l.b16 %v1168
    %v2200 = vunpack.c.l.b16 %v1169
    %v2201 = vunpack.c.l.b16 %v1170
    %v2202 = vunpack.c.l.b16 %v1171
    %v2203 = vunpack.c.l.b16 %v1172
    %v2204 = vunpack.c.l.b16 %v1173
    %v2205 = vunpack.c.l.b16 %v1174
    %v2206 = vunpack.c.l.b16 %v1175
    %v2207 = vunpack.c.l.b16 %v1176
    %v2208 = vunpack.c.l.b16 %v1177
    %v2209 = vunpack.c.l.b16 %v1178
    %v2210 = vunpack.c.l.b16 %v1179
    %v2211 = vunpack.c.l.b16 %v1180
    %v2212 = vunpack.c.l.b16 %v1181
    %v2213 = vunpack.c.l.b16 %v1182
    %v2214 = vunpack.c.l.b16 %v1183
    %v2215 = vunpack.c.l.b16 %v1184
    %v2216 = vunpack.c.l.b16 %v1185
    %v2217 = vunpack.c.l.b16 %v1186
    %v2218 = vunpack.c.l.b16 %v1187
    %v2219 = vunpack.c.l.b16 %v1188
    %v2220 = vunpack.c.l.b16 %v1189
    %v2221 = vunpack.c.l.b16 %v1190
    %v2222 = vunpack.c.l.b16 %v1191
    %v2223 = vunpack.c.l.b16 %v1192
    %v2224 = vunpack.c.l.b16 %v1193
    %v2225 = vunpack.c.l.b16 %v1194
    %v2226 = vunpack.c.l.b16 %v1195
    %v2227 = vunpack.c.l.b16 %v1196
    %v2228 = vunpack.c.l.b16 %v1197
    %v2229 = vunpack.c.l.b16 %v1198
    %v2230 = vunpack.c.l.b16 %v1199
    %v2231 = vunpack.c.l.b16 %v1200
    %v2232 = vunpack.c.l.b16 %v1201
    %v2233 = vunpack.c.l.b16 %v1202
    %v2234 = vunpack.c.l.b16 %v1203
    %v2235 = vunpack.c.l.b16 %v1204
    %v2236 = vunpack.c.l.b16 %v1205
    %v2237 = vunpack.c.l.b16 %v1206
    %v2238 = vunpack.c.l.b16 %v1207
    %v2239 = vunpack.c.l.b16 %v1208
    %v2240 = vunpack.c.l.b16 %v1209
    %v2241 = vunpack.c.l.b16 %v1210
    %v2242 = vunpack.c.l.b16 %v1211
    %v2243 = vunpack.c.l.b16 %v1212
    %v2244 = vunpack.c.l.b16 %v1213
    %v2245 = vunpack.c.l.b16 %v1214
    %v2246 = vunpack.c.l.b16 %v1215
    %v2247 = vunpack.c.l.b16 %v1216
    %v2248 = vunpack.c.l.b16 %v1217
    %v2249 = vunpack.c.l.b16 %v1218
    %v2250 = vunpack.c.l.b16 %v1219
    %v2251 = vunpack.c.l.b16 %v1220
    %v2252 = vunpack.c.l.b16 %v1221
    %v2253 = vunpack.c.l.b16 %v1222
    %v2254 = vunpack.c.l.b16 %v1223
    %v2255 = vunpack.c.l.b16 %v1224
    %v2256 = vunpack.c.l.b16 %v1225
    %v2257 = vunpack.c.l.b16 %v1226
    %v2258 = vunpack.c.l.b16 %v1227
    %v2259 = vunpack.c.l.b16 %v1228
    %v2260 = vunpack.c.l.b16 %v1229
    %v2261 = vunpack.c.l.b16 %v1230
    %v2262 = vunpack.c.l.b16 %v1231
    %v2263 = vunpack.c.l.b16 %v1232
    %v2264 = vunpack.c.l.b16 %v1233
    %v2265 = vunpack.c.l.b16 %v1234
    %v2266 = vunpack.c.l.b16 %v1235
    %v2267 = vunpack.c.l.b16 %v1236
    %v2268 = vunpack.c.l.b16 %v1237
    %v2269 = vunpack.c.l.b16 %v1238
    %v2270 = vunpack.c.l.b16 %v1239
    %v2271 = vunpack.c.l.b16 %v1240
    %v2272 = vunpack.c.l.b16 %v1241
    %v2273 = vunpack.c.l.b16 %v1242
    %v2274 = vunpack.c.l.b16 %v1243
    %v2275 = vunpack.c.l.b16 %v1244
    %v2276 = vunpack.c.l.b16 %v1245
    %v2277 = vunpack.c.l.b16 %v1246
    %v2278 = vunpack.c.l.b16 %v1247
    %v2279 = vunpack.c.l.b16 %v1248
    %v2280 = vunpack.c.l.b16 %v1249
    %v2281 = vunpack.c.l.b16 %v1250
    %v2282 = vunpack.c.l.b16 %v1251
    %v2283 = vunpack.c.l.b16 %v1252
    %v2284 = vunpack.c.l.b16 %v1253
    %v2285 = vunpack.c.l.b16 %v1254
    %v2286 = vunpack.c.l.b16 %v1255
    %v2287 = vunpack.c.l.b16 %v1256
    %v2288 = vunpack.c.l.b16 %v1257
    %v2289 = vunpack.c.l.b16 %v1258
    %v2290 = vunpack.c.l.b16 %v1259
    %v2291 = vunpack.c.l.b16 %v1260
    %v2292 = vunpack.c.l.b16 %v1261
    %v2293 = vunpack.c.l.b16 %v1262
    %v2294 = vunpack.c.l.b16 %v1263
    %v2295 = vunpack.c.l.b16 %v1264
    %v2296 = vunpack.c.l.b16 %v1265
    %v2297 = vunpack.c.l.b16 %v1266
    %v2298 = vunpack.c.l.b16 %v1267
    %v2299 = vunpack.c.l.b16 %v1268
    %v2300 = vunpack.c.l.b16 %v1269
    %v2301 = vunpack.c.l.b16 %v1270
    %v2302 = vunpack.c.l.b16 %v1271
    %v2303 = vunpack.c.l.b16 %v1272
    %v2304 = vunpack.c.l.b16 %v1273
    %v2305 = vunpack.c.l.b16 %v1274
    %v2306 = vunpack.c.l.b16 %v1275
    %v2307 = vunpack.c.l.b16 %v1276
    %v2308 = vunpack.c.l.b16 %v1277
    %v2309 = vunpack.c.l.b16 %v1278
    %v2310 = vunpack.c.l.b16 %v1279
    %v2311 = vunpack.c.l.b16 %v1280
    %v2312 = vunpack.c.l.b16 %v1281
    %v2313 = vunpack.c.l.b16 %v1282
    %v2314 = vunpack.c.l.b16 %v1283
    %v2315 = vunpack.c.l.b16 %v1284
    %v2316 = vunpack.c.l.b16 %v1285
    %v2317 = vunpack.c.l.b16 %v1286
    %v2318 = vunpack.c.l.b16 %v1287
    %v2319 = vunpack.c.l.b16 %v1288
    %v2320 = vunpack.c.l.b16 %v1289
    %v2321 = vunpack.c.l.b16 %v1290
    %v2322 = vunpack.c.l.b16 %v1291
    %v2323 = vunpack.c.l.b16 %v1292
    %v2324 = vunpack.c.l.b16 %v1293
    %v2325 = vunpack.c.l.b16 %v1294
    %v2326 = vunpack.c.l.b16 %v1295
    %v2327 = vunpack.c.l.b16 %v1296
    %v2328 = vunpack.c.l.b16 %v1297
    %v2329 = vunpack.c.l.b16 %v1298
    %v2330 = vunpack.c.l.b16 %v1299
    %v2331 = vunpack.c.l.b16 %v1300
    %v2332 = vunpack.c.l.b16 %v1301
    %v2333 = vunpack.c.l.b16 %v1302
    %v2334 = vunpack.c.l.b16 %v1303
    %v2335 = vunpack.c.l.b16 %v1304
    %v2336 = vunpack.c.l.b16 %v1305
    %v2337 = vunpack.c.l.b16 %v1306
    %v2338 = vunpack.c.l.b16 %v1307
    %v2339 = vunpack.c.l.b16 %v1308
    %v2340 = vunpack.c.l.b16 %v1309
    %v2341 = vunpack.c.l.b16 %v1310
    %v2342 = vunpack.c.l.b16 %v1311
    %v2343 = vunpack.c.l.b16 %v1312
    %v2344 = vunpack.c.l.b16 %v1313
    %v2345 = vunpack.c.l.b16 %v1314
    %v2346 = vunpack.c.l.b16 %v1315
    %v2347 = vunpack.c.l.b16 %v1316
    %v2348 = vunpack.c.l.b16 %v1317
    %v2349 = vunpack.c.l.b16 %v1318
    %v2350 = vunpack.c.l.b16 %v1319
    %v2351 = vunpack.c.l.b16 %v1320
    %v2352 = vunpack.c.l.b16 %v1321
    %v2353 = vunpack.c.l.b16 %v1322
    %v2354 = vunpack.c.l.b16 %v1323
    %v2355 = vunpack.c.l.b16 %v1324
    %v2356 = vunpack.c.l.b16 %v1325
    %v2357 = vunpack.c.l.b16 %v1326
    %v2358 = vunpack.c.l.b16 %v1327
    %v2359 = vunpack.c.l.b16 %v1328
    %v2360 = vunpack.c.l.b16 %v1329
    %v2361 = vunpack.c.l.b16 %v1330
    %v2362 = vunpack.c.l.b16 %v1331
    %v2363 = vunpack.c.l.b16 %v1332
    %v2364 = vunpack.c.l.b16 %v1333
    %v2365 = vunpack.c.l.b16 %v1334
    %v2366 = vunpack.c.l.b16 %v1335
    %v2367 = vunpack.c.l.b16 %v1336
    %v2368 = vunpack.c.l.b16 %v1337
    %v2369 = vunpack.c.l.b16 %v1338
    %v2370 = vunpack.c.l.b16 %v1339
    %v2371 = vunpack.c.l.b16 %v1340
    %v2372 = vunpack.c.l.b16 %v1341
    %v2373 = vunpack.c.l.b16 %v1342
    %v2374 = vunpack.c.l.b16 %v1343
    %v2375 = vunpack.c.l.b16 %v1344
    %v2376 = vunpack.c.l.b16 %v1345
    %v2377 = vunpack.c.l.b16 %v1346
    %v2378 = vunpack.c.l.b16 %v1347
    %v2379 = vunpack.c.l.b16 %v1348
    %v2380 = vunpack.c.l.b16 %v1349
    %v2381 = vunpack.c.l.b16 %v1350
    %v2382 = vunpack.c.l.b16 %v1351
    %v2383 = vunpack.c.l.b16 %v1352
    %v2384 = vunpack.c.l.b16 %v1353
    %v2385 = vunpack.c.l.b16 %v1354
    %v2386 = vunpack.c.l.b16 %v1355
    %v2387 = vunpack.c.l.b16 %v1356
    %v2388 = vunpack.c.l.b16 %v1357
    %v2389 = vunpack.c.l.b16 %v1358
    %v2390 = vunpack.c.l.b16 %v1359
    %v2391 = vunpack.c.l.b16 %v1360
    %v2392 = vunpack.c.l.b16 %v1361
    %v2393 = vunpack.c.l.b16 %v1362
    %v2394 = vunpack.c.l.b16 %v1363
    %v2395 = vunpack.c.l.b16 %v1364
    %v2396 = vunpack.c.l.b16 %v1365
    %v2397 = vunpack.c.l.b16 %v1366
    %v2398 = vunpack.c.l.b16 %v1367
    %v2399 = vunpack.c.l.b16 %v1368
    %v2400 = vunpack.c.l.b16 %v1369
    %v2401 = vunpack.c.l.b16 %v1370
    %v2402 = vunpack.c.l.b16 %v1371
    %v2403 = vunpack.c.l.b16 %v1372
    %v2404 = vunpack.c.l.b16 %v1373
    %v2405 = vunpack.c.l.b16 %v1374
    %v2406 = vpack.c.b16 %v1895, %v1894
    %v2407 = vpack.c.b16 %v1897, %v1896
    %v2408 = vpack.c.b16 %v1899, %v1898
    %v2409 = vpack.c.b16 %v1901, %v1900
    %v2410 = vpack.c.b16 %v1903, %v1902
    %v2411 = vpack.c.b16 %v1905, %v1904
    %v2412 = vpack.c.b16 %v1907, %v1906
    %v2413 = vpack.c.b16 %v1909, %v1908
    %v2414 = vpack.c.b16 %v1911, %v1910
    %v2415 = vpack.c.b16 %v1913, %v1912
    %v2416 = vpack.c.b16 %v1915, %v1914
    %v2417 = vpack.c.b16 %v1917, %v1916
    %v2418 = vpack.c.b16 %v1919, %v1918
    %v2419 = vpack.c.b16 %v1921, %v1920
    %v2420 = vpack.c.b16 %v1923, %v1922
    %v2421 = vpack.c.b16 %v1925, %v1924
    %v2422 = vpack.c.b16 %v1927, %v1926
    %v2423 = vpack.c.b16 %v1929, %v1928
    %v2424 = vpack.c.b16 %v1931, %v1930
    %v2425 = vpack.c.b16 %v1933, %v1932
    %v2426 = vpack.c.b16 %v1935, %v1934
    %v2427 = vpack.c.b16 %v1937, %v1936
    %v2428 = vpack.c.b16 %v1939, %v1938
    %v2429 = vpack.c.b16 %v1941, %v1940
    %v2430 = vpack.c.b16 %v1943, %v1942
    %v2431 = vpack.c.b16 %v1945, %v1944
    %v2432 = vpack.c.b16 %v1947, %v1946
    %v2433 = vpack.c.b16 %v1949, %v1948
    %v2434 = vpack.c.b16 %v1951, %v1950
    %v2435 = vpack.c.b16 %v1953, %v1952
    %v2436 = vpack.c.b16 %v1955, %v1954
    %v2437 = vpack.c.b16 %v1957, %v1956
    %v2438 = vpack.c.b16 %v1959, %v1958
    %v2439 = vpack.c.b16 %v1961, %v1960
    %v2440 = vpack.c.b16 %v1963, %v1962
    %v2441 = vpack.c.b16 %v1965, %v1964
    %v2442 = vpack.c.b16 %v1967, %v1966
    %v2443 = vpack.c.b16 %v1969, %v1968
    %v2444 = vpack.c.b16 %v1971, %v1970
    %v2445 = vpack.c.b16 %v1973, %v1972
    %v2446 = vpack.c.b16 %v1975, %v1974
    %v2447 = vpack.c.b16 %v1977, %v1976
    %v2448 = vpack.c.b16 %v1979, %v1978
    %v2449 = vpack.c.b16 %v1981, %v1980
    %v2450 = vpack.c.b16 %v1983, %v1982
    %v2451 = vpack.c.b16 %v1985, %v1984
    %v2452 = vpack.c.b16 %v1987, %v1986
    %v2453 = vpack.c.b16 %v1989, %v1988
    %v2454 = vpack.c.b16 %v1991, %v1990
    %v2455 = vpack.c.b16 %v1993, %v1992
    %v2456 = vpack.c.b16 %v1995, %v1994
    %v2457 = vpack.c.b16 %v1997, %v1996
    %v2458 = vpack.c.b16 %v1999, %v1998
    %v2459 = vpack.c.b16 %v2001, %v2000
    %v2460 = vpack.c.b16 %v2003, %v2002
    %v2461 = vpack.c.b16 %v2005, %v2004
    %v2462 = vpack.c.b16 %v2007, %v2006
    %v2463 = vpack.c.b16 %v2009, %v2008
    %v2464 = vpack.c.b16 %v2011, %v2010
    %v2465 = vpack.c.b16 %v2013, %v2012
    %v2466 = vpack.c.b16 %v2015, %v2014
    %v2467 = vpack.c.b16 %v2017, %v2016
    %v2468 = vpack.c.b16 %v2019, %v2018
    %v2469 = vpack.c.b16 %v2021, %v2020
    %v2470 = vpack.c.b16 %v2023, %v2022
    %v2471 = vpack.c.b16 %v2025, %v2024
    %v2472 = vpack.c.b16 %v2027, %v2026
    %v2473 = vpack.c.b16 %v2029, %v2028
    %v2474 = vpack.c.b16 %v2031, %v2030
    %v2475 = vpack.c.b16 %v2033, %v2032
    %v2476 = vpack.c.b16 %v2035, %v2034
    %v2477 = vpack.c.b16 %v2037, %v2036
    %v2478 = vpack.c.b16 %v2039, %v2038
    %v2479 = vpack.c.b16 %v2041, %v2040
    %v2480 = vpack.c.b16 %v2043, %v2042
    %v2481 = vpack.c.b16 %v2045, %v2044
    %v2482 = vpack.c.b16 %v2047, %v2046
    %v2483 = vpack.c.b16 %v2049, %v2048
    %v2484 = vpack.c.b16 %v2051, %v2050
    %v2485 = vpack.c.b16 %v2053, %v2052
    %v2486 = vpack.c.b16 %v2055, %v2054
    %v2487 = vpack.c.b16 %v2057, %v2056
    %v2488 = vpack.c.b16 %v2059, %v2058
    %v2489 = vpack.c.b16 %v2061, %v2060
    %v2490 = vpack.c.b16 %v2063, %v2062
    %v2491 = vpack.c.b16 %v2065, %v2064
    %v2492 = vpack.c.b16 %v2067, %v2066
    %v2493 = vpack.c.b16 %v2069, %v2068
    %v2494 = vpack.c.b16 %v2071, %v2070
    %v2495 = vpack.c.b16 %v2073, %v2072
    %v2496 = vpack.c.b16 %v2075, %v2074
    %v2497 = vpack.c.b16 %v2077, %v2076
    %v2498 = vpack.c.b16 %v2079, %v2078
    %v2499 = vpack.c.b16 %v2081, %v2080
    %v2500 = vpack.c.b16 %v2083, %v2082
    %v2501 = vpack.c.b16 %v2085, %v2084
    %v2502 = vpack.c.b16 %v2087, %v2086
    %v2503 = vpack.c.b16 %v2089, %v2088
    %v2504 = vpack.c.b16 %v2091, %v2090
    %v2505 = vpack.c.b16 %v2093, %v2092
    %v2506 = vpack.c.b16 %v2095, %v2094
    %v2507 = vpack.c.b16 %v2097, %v2096
    %v2508 = vpack.c.b16 %v2099, %v2098
    %v2509 = vpack.c.b16 %v2101, %v2100
    %v2510 = vpack.c.b16 %v2103, %v2102
    %v2511 = vpack.c.b16 %v2105, %v2104
    %v2512 = vpack.c.b16 %v2107, %v2106
    %v2513 = vpack.c.b16 %v2109, %v2108
    %v2514 = vpack.c.b16 %v2111, %v2110
    %v2515 = vpack.c.b16 %v2113, %v2112
    %v2516 = vpack.c.b16 %v2115, %v2114
    %v2517 = vpack.c.b16 %v2117, %v2116
    %v2518 = vpack.c.b16 %v2119, %v2118
    %v2519 = vpack.c.b16 %v2121, %v2120
    %v2520 = vpack.c.b16 %v2123, %v2122
    %v2521 = vpack.c.b16 %v2125, %v2124
    %v2522 = vpack.c.b16 %v2127, %v2126
    %v2523 = vpack.c.b16 %v2129, %v2128
    %v2524 = vpack.c.b16 %v2131, %v2130
    %v2525 = vpack.c.b16 %v2133, %v2132
    %v2526 = vpack.c.b16 %v2135, %v2134
    %v2527 = vpack.c.b16 %v2137, %v2136
    %v2528 = vpack.c.b16 %v2139, %v2138
    %v2529 = vpack.c.b16 %v2141, %v2140
    %v2530 = vpack.c.b16 %v2143, %v2142
    %v2531 = vpack.c.b16 %v2145, %v2144
    %v2532 = vpack.c.b16 %v2147, %v2146
    %v2533 = vpack.c.b16 %v2149, %v2148
    %v2534 = vpack.c.b16 %v2151, %v2150
    %v2535 = vpack.c.b16 %v2153, %v2152
    %v2536 = vpack.c.b16 %v2155, %v2154
    %v2537 = vpack.c.b16 %v2157, %v2156
    %v2538 = vpack.c.b16 %v2159, %v2158
    %v2539 = vpack.c.b16 %v2161, %v2160
    %v2540 = vpack.c.b16 %v2163, %v2162
    %v2541 = vpack.c.b16 %v2165, %v2164
    %v2542 = vpack.c.b16 %v2167, %v2166
    %v2543 = vpack.c.b16 %v2169, %v2168
    %v2544 = vpack.c.b16 %v2171, %v2170
    %v2545 = vpack.c.b16 %v2173, %v2172
    %v2546 = vpack.c.b16 %v2175, %v2174
    %v2547 = vpack.c.b16 %v2177, %v2176
    %v2548 = vpack.c.b16 %v2179, %v2178
    %v2549 = vpack.c.b16 %v2181, %v2180
    %v2550 = vpack.c.b16 %v2183, %v2182
    %v2551 = vpack.c.b16 %v2185, %v2184
    %v2552 = vpack.c.b16 %v2187, %v2186
    %v2553 = vpack.c.b16 %v2189, %v2188
    %v2554 = vpack.c.b16 %v2191, %v2190
    %v2555 = vpack.c.b16 %v2193, %v2192
    %v2556 = vpack.c.b16 %v2195, %v2194
    %v2557 = vpack.c.b16 %v2197, %v2196
    %v2558 = vpack.c.b16 %v2199, %v2198
    %v2559 = vpack.c.b16 %v2201, %v2200
    %v2560 = vpack.c.b16 %v2203, %v2202
    %v2561 = vpack.c.b16 %v2205, %v2204
    %v2562 = vpack.c.b16 %v2207, %v2206
    %v2563 = vpack.c.b16 %v2209, %v2208
    %v2564 = vpack.c.b16 %v2211, %v2210
    %v2565 = vpack.c.b16 %v2213, %v2212
    %v2566 = vpack.c.b16 %v2215, %v2214
    %v2567 = vpack.c.b16 %v2217, %v2216
    %v2568 = vpack.c.b16 %v2219, %v2218
    %v2569 = vpack.c.b16 %v2221, %v2220
    %v2570 = vpack.c.b16 %v2223, %v2222
    %v2571 = vpack.c.b16 %v2225, %v2224
    %v2572 = vpack.c.b16 %v2227, %v2226
    %v2573 = vpack.c.b16 %v2229, %v2228
    %v2574 = vpack.c.b16 %v2231, %v2230
    %v2575 = vpack.c.b16 %v2233, %v2232
    %v2576 = vpack.c.b16 %v2235, %v2234
    %v2577 = vpack.c.b16 %v2237, %v2236
    %v2578 = vpack.c.b16 %v2239, %v2238
    %v2579 = vpack.c.b16 %v2241, %v2240
    %v2580 = vpack.c.b16 %v2243, %v2242
    %v2581 = vpack.c.b16 %v2245, %v2244
    %v2582 = vpack.c.b16 %v2247, %v2246
    %v2583 = vpack.c.b16 %v2249, %v2248
    %v2584 = vpack.c.b16 %v2251, %v2250
    %v2585 = vpack.c.b16 %v2253, %v2252
    %v2586 = vpack.c.b16 %v2255, %v2254
    %v2587 = vpack.c.b16 %v2257, %v2256
    %v2588 = vpack.c.b16 %v2259, %v2258
    %v2589 = vpack.c.b16 %v2261, %v2260
    %v2590 = vpack.c.b16 %v2263, %v2262
    %v2591 = vpack.c.b16 %v2265, %v2264
    %v2592 = vpack.c.b16 %v2267, %v2266
    %v2593 = vpack.c.b16 %v2269, %v2268
    %v2594 = vpack.c.b16 %v2271, %v2270
    %v2595 = vpack.c.b16 %v2273, %v2272
    %v2596 = vpack.c.b16 %v2275, %v2274
    %v2597 = vpack.c.b16 %v2277, %v2276
    %v2598 = vpack.c.b16 %v2279, %v2278
    %v2599 = vpack.c.b16 %v2281, %v2280
    %v2600 = vpack.c.b16 %v2283, %v2282
    %v2601 = vpack.c.b16 %v2285, %v2284
    %v2602 = vpack.c.b16 %v2287, %v2286
    %v2603 = vpack.c.b16 %v2289, %v2288
    %v2604 = vpack.c.b16 %v2291, %v2290
    %v2605 = vpack.c.b16 %v2293, %v2292
    %v2606 = vpack.c.b16 %v2295, %v2294
    %v2607 = vpack.c.b16 %v2297, %v2296
    %v2608 = vpack.c.b16 %v2299, %v2298
    %v2609 = vpack.c.b16 %v2301, %v2300
    %v2610 = vpack.c.b16 %v2303, %v2302
    %v2611 = vpack.c.b16 %v2305, %v2304
    %v2612 = vpack.c.b16 %v2307, %v2306
    %v2613 = vpack.c.b16 %v2309, %v2308
    %v2614 = vpack.c.b16 %v2311, %v2310
    %v2615 = vpack.c.b16 %v2313, %v2312
    %v2616 = vpack.c.b16 %v2315, %v2314
    %v2617 = vpack.c.b16 %v2317, %v2316
    %v2618 = vpack.c.b16 %v2319, %v2318
    %v2619 = vpack.c.b16 %v2321, %v2320
    %v2620 = vpack.c.b16 %v2323, %v2322
    %v2621 = vpack.c.b16 %v2325, %v2324
    %v2622 = vpack.c.b16 %v2327, %v2326
    %v2623 = vpack.c.b16 %v2329, %v2328
    %v2624 = vpack.c.b16 %v2331, %v2330
    %v2625 = vpack.c.b16 %v2333, %v2332
    %v2626 = vpack.c.b16 %v2335, %v2334
    %v2627 = vpack.c.b16 %v2337, %v2336
    %v2628 = vpack.c.b16 %v2339, %v2338
    %v2629 = vpack.c.b16 %v2341, %v2340
    %v2630 = vpack.c.b16 %v2343, %v2342
    %v2631 = vpack.c.b16 %v2345, %v2344
    %v2632 = vpack.c.b16 %v2347, %v2346
    %v2633 = vpack.c.b16 %v2349, %v2348
    %v2634 = vpack.c.b16 %v2351, %v2350
    %v2635 = vpack.c.b16 %v2353, %v2352
    %v2636 = vpack.c.b16 %v2355, %v2354
    %v2637 = vpack.c.b16 %v2357, %v2356
    %v2638 = vpack.c.b16 %v2359, %v2358
    %v2639 = vpack.c.b16 %v2361, %v2360
    %v2640 = vpack.c.b16 %v2363, %v2362
    %v2641 = vpack.c.b16 %v2365, %v2364
    %v2642 = vpack.c.b16 %v2367, %v2366
    %v2643 = vpack.c.b16 %v2369, %v2368
    %v2644 = vpack.c.b16 %v2371, %v2370
    %v2645 = vpack.c.b16 %v2373, %v2372
    %v2646 = vpack.c.b16 %v2375, %v2374
    %v2647 = vpack.c.b16 %v2377, %v2376
    %v2648 = vpack.c.b16 %v2379, %v2378
    %v2649 = vpack.c.b16 %v2381, %v2380
    %v2650 = vpack.c.b16 %v2383, %v2382
    %v2651 = vpack.c.b16 %v2385, %v2384
    %v2652 = vpack.c.b16 %v2387, %v2386
    %v2653 = vpack.c.b16 %v2389, %v2388
    %v2654 = vpack.c.b16 %v2391, %v2390
    %v2655 = vpack.c.b16 %v2393, %v2392
    %v2656 = vpack.c.b16 %v2395, %v2394
    %v2657 = vpack.c.b16 %v2397, %v2396
    %v2658 = vpack.c.b16 %v2399, %v2398
    %v2659 = vpack.c.b16 %v2401, %v2400
    %v2660 = vpack.c.b16 %v2403, %v2402
    %v2661 = vpack.c.b16 %v2405, %v2404
    %2918 = vmatprep.subr.bf16.mxu0 0
    %2919 = vmatpush1.bf16.msra.mxu0 %v2406
    %2920 = vmatprep.subr.bf16.mxu0 0
    %2921 = vmatpush1.bf16.msra.mxu0 %v2407
    %2922 = vmatprep.subr.bf16.mxu0 0
    %2923 = vmatpush1.bf16.msra.mxu0 %v2408
    %2924 = vmatprep.subr.bf16.mxu0 0
    %2925 = vmatpush1.bf16.msra.mxu0 %v2409
    %2926 = vmatprep.subr.bf16.mxu0 0
    %2927 = vmatpush1.bf16.msra.mxu0 %v2410
    %2928 = vmatprep.subr.bf16.mxu0 0
    %2929 = vmatpush1.bf16.msra.mxu0 %v2411
    %2930 = vmatprep.subr.bf16.mxu0 0
    %2931 = vmatpush1.bf16.msra.mxu0 %v2412
    %2932 = vmatprep.subr.bf16.mxu0 0
    %2933 = vmatpush1.bf16.msra.mxu0 %v2413
    %2934 = vmatprep.subr.bf16.mxu0 0
    %2935 = vmatpush1.bf16.msra.mxu0 %v2414
    %2936 = vmatprep.subr.bf16.mxu0 0
    %2937 = vmatpush1.bf16.msra.mxu0 %v2415
    %2938 = vmatprep.subr.bf16.mxu0 0
    %2939 = vmatpush1.bf16.msra.mxu0 %v2416
    %2940 = vmatprep.subr.bf16.mxu0 0
    %2941 = vmatpush1.bf16.msra.mxu0 %v2417
    %2942 = vmatprep.subr.bf16.mxu0 0
    %2943 = vmatpush1.bf16.msra.mxu0 %v2418
    %2944 = vmatprep.subr.bf16.mxu0 0
    %2945 = vmatpush1.bf16.msra.mxu0 %v2419
    %2946 = vmatprep.subr.bf16.mxu0 0
    %2947 = vmatpush1.bf16.msra.mxu0 %v2420
    %2948 = vmatprep.subr.bf16.mxu0 0
    %2949 = vmatpush1.bf16.msra.mxu0 %v2421
    %2950 = vmatprep.mubr.bf16.mxu0 %v832
    %2951 = vmatmul.mubr.bf16.gmra.mrb[0].mxu0 %v831
    %v2952 = vpop.f32.mrb[0].mxu0
    %v2953 = vadd.f32 %v1380, %v2952
    %v2954 = vpop.f32.mrb[0].mxu0
    %v2955 = vpop.f32.mrb[0].mxu0
    %v2956 = vadd.f32 %v1380, %v2955
    %v2957 = vpop.f32.mrb[0].mxu0
    %2958 = vdwg.mxu0
    %2959 = vmatprep.subr.bf16.mxu0 0
    %2960 = vmatpush1.bf16.msra.mxu0 %v2422
    %2961 = vmatprep.subr.bf16.mxu0 0
    %2962 = vmatpush1.bf16.msra.mxu0 %v2423
    %2963 = vmatprep.subr.bf16.mxu0 0
    %2964 = vmatpush1.bf16.msra.mxu0 %v2424
    %2965 = vmatprep.subr.bf16.mxu0 0
    %2966 = vmatpush1.bf16.msra.mxu0 %v2425
    %2967 = vmatprep.subr.bf16.mxu0 0
    %2968 = vmatpush1.bf16.msra.mxu0 %v2426
    %2969 = vmatprep.subr.bf16.mxu0 0
    %2970 = vmatpush1.bf16.msra.mxu0 %v2427
    %2971 = vmatprep.subr.bf16.mxu0 0
    %2972 = vmatpush1.bf16.msra.mxu0 %v2428
    %2973 = vmatprep.subr.bf16.mxu0 0
    %2974 = vmatpush1.bf16.msra.mxu0 %v2429
    %2975 = vmatprep.subr.bf16.mxu0 0
    %2976 = vmatpush1.bf16.msra.mxu0 %v2430
    %2977 = vmatprep.subr.bf16.mxu0 0
    %2978 = vmatpush1.bf16.msra.mxu0 %v2431
    %2979 = vmatprep.subr.bf16.mxu0 0
    %2980 = vmatpush1.bf16.msra.mxu0 %v2432
    %2981 = vmatprep.subr.bf16.mxu0 0
    %2982 = vmatpush1.bf16.msra.mxu0 %v2433
    %2983 = vmatprep.subr.bf16.mxu0 0
    %2984 = vmatpush1.bf16.msra.mxu0 %v2434
    %2985 = vmatprep.subr.bf16.mxu0 0
    %2986 = vmatpush1.bf16.msra.mxu0 %v2435
    %2987 = vmatprep.subr.bf16.mxu0 0
    %2988 = vmatpush1.bf16.msra.mxu0 %v2436
    %2989 = vmatprep.subr.bf16.mxu0 0
    %2990 = vmatpush1.bf16.msra.mxu0 %v2437
    %2991 = vmatprep.mubr.bf16.mxu0 %v834
    %2992 = vmatmul.mubr.bf16.gmra.mrb[0].mxu0 %v833
    %v2993 = vpop.f32.mrb[0].mxu0
    %v2994 = vadd.f32 %v2953, %v2993
    %v2995 = vpop.f32.mrb[0].mxu0
    %v2996 = vpop.f32.mrb[0].mxu0
    %v2997 = vadd.f32 %v2956, %v2996
    %v2998 = vpop.f32.mrb[0].mxu0
    %2999 = vdwg.mxu0
    %3000 = vmatprep.subr.bf16.mxu0 0
    %3001 = vmatpush1.bf16.msra.mxu0 %v2438
    %3002 = vmatprep.subr.bf16.mxu0 0
    %3003 = vmatpush1.bf16.msra.mxu0 %v2439
    %3004 = vmatprep.subr.bf16.mxu0 0
    %3005 = vmatpush1.bf16.msra.mxu0 %v2440
    %3006 = vmatprep.subr.bf16.mxu0 0
    %3007 = vmatpush1.bf16.msra.mxu0 %v2441
    %3008 = vmatprep.subr.bf16.mxu0 0
    %3009 = vmatpush1.bf16.msra.mxu0 %v2442
    %3010 = vmatprep.subr.bf16.mxu0 0
    %3011 = vmatpush1.bf16.msra.mxu0 %v2443
    %3012 = vmatprep.subr.bf16.mxu0 0
    %3013 = vmatpush1.bf16.msra.mxu0 %v2444
    %3014 = vmatprep.subr.bf16.mxu0 0
    %3015 = vmatpush1.bf16.msra.mxu0 %v2445
    %3016 = vmatprep.subr.bf16.mxu0 0
    %3017 = vmatpush1.bf16.msra.mxu0 %v2446
    %3018 = vmatprep.subr.bf16.mxu0 0
    %3019 = vmatpush1.bf16.msra.mxu0 %v2447
    %3020 = vmatprep.subr.bf16.mxu0 0
    %3021 = vmatpush1.bf16.msra.mxu0 %v2448
    %3022 = vmatprep.subr.bf16.mxu0 0
    %3023 = vmatpush1.bf16.msra.mxu0 %v2449
    %3024 = vmatprep.subr.bf16.mxu0 0
    %3025 = vmatpush1.bf16.msra.mxu0 %v2450
    %3026 = vmatprep.subr.bf16.mxu0 0
    %3027 = vmatpush1.bf16.msra.mxu0 %v2451
    %3028 = vmatprep.subr.bf16.mxu0 0
    %3029 = vmatpush1.bf16.msra.mxu0 %v2452
    %3030 = vmatprep.subr.bf16.mxu0 0
    %3031 = vmatpush1.bf16.msra.mxu0 %v2453
    %3032 = vmatprep.mubr.bf16.mxu0 %v836
    %3033 = vmatmul.mubr.bf16.gmra.mrb[0].mxu0 %v835
    %v3034 = vpop.f32.mrb[0].mxu0
    %v3035 = vadd.f32 %v2994, %v3034
    %v3036 = vpop.f32.mrb[0].mxu0
    %v3037 = vpop.f32.mrb[0].mxu0
    %v3038 = vadd.f32 %v2997, %v3037
    %v3039 = vpop.f32.mrb[0].mxu0
    %3040 = vdwg.mxu0
    %3041 = vmatprep.subr.bf16.mxu0 0
    %3042 = vmatpush1.bf16.msra.mxu0 %v2454
    %3043 = vmatprep.subr.bf16.mxu0 0
    %3044 = vmatpush1.bf16.msra.mxu0 %v2455
    %3045 = vmatprep.subr.bf16.mxu0 0
    %3046 = vmatpush1.bf16.msra.mxu0 %v2456
    %3047 = vmatprep.subr.bf16.mxu0 0
    %3048 = vmatpush1.bf16.msra.mxu0 %v2457
    %3049 = vmatprep.subr.bf16.mxu0 0
    %3050 = vmatpush1.bf16.msra.mxu0 %v2458
    %3051 = vmatprep.subr.bf16.mxu0 0
    %3052 = vmatpush1.bf16.msra.mxu0 %v2459
    %3053 = vmatprep.subr.bf16.mxu0 0
    %3054 = vmatpush1.bf16.msra.mxu0 %v2460
    %3055 = vmatprep.subr.bf16.mxu0 0
    %3056 = vmatpush1.bf16.msra.mxu0 %v2461
    %3057 = vmatprep.subr.bf16.mxu0 0
    %3058 = vmatpush1.bf16.msra.mxu0 %v2462
    %3059 = vmatprep.subr.bf16.mxu0 0
    %3060 = vmatpush1.bf16.msra.mxu0 %v2463
    %3061 = vmatprep.subr.bf16.mxu0 0
    %3062 = vmatpush1.bf16.msra.mxu0 %v2464
    %3063 = vmatprep.subr.bf16.mxu0 0
    %3064 = vmatpush1.bf16.msra.mxu0 %v2465
    %3065 = vmatprep.subr.bf16.mxu0 0
    %3066 = vmatpush1.bf16.msra.mxu0 %v2466
    %3067 = vmatprep.subr.bf16.mxu0 0
    %3068 = vmatpush1.bf16.msra.mxu0 %v2467
    %3069 = vmatprep.subr.bf16.mxu0 0
    %3070 = vmatpush1.bf16.msra.mxu0 %v2468
    %3071 = vmatprep.subr.bf16.mxu0 0
    %3072 = vmatpush1.bf16.msra.mxu0 %v2469
    %3073 = vmatprep.mubr.bf16.mxu0 %v838
    %3074 = vmatmul.mubr.bf16.gmra.mrb[0].mxu0 %v837
    %v3075 = vpop.f32.mrb[0].mxu0
    %v3076 = vadd.f32 %v3035, %v3075
    %v3077 = vpop.f32.mrb[0].mxu0
    %v3078 = vpop.f32.mrb[0].mxu0
    %v3079 = vadd.f32 %v3038, %v3078
    %v3080 = vpop.f32.mrb[0].mxu0
    %3081 = vdwg.mxu0
    %3082 = vmatprep.subr.bf16.mxu0 0
    %3083 = vmatpush1.bf16.msra.mxu0 %v2470
    %3084 = vmatprep.subr.bf16.mxu0 0
    %3085 = vmatpush1.bf16.msra.mxu0 %v2471
    %3086 = vmatprep.subr.bf16.mxu0 0
    %3087 = vmatpush1.bf16.msra.mxu0 %v2472
    %3088 = vmatprep.subr.bf16.mxu0 0
    %3089 = vmatpush1.bf16.msra.mxu0 %v2473
    %3090 = vmatprep.subr.bf16.mxu0 0
    %3091 = vmatpush1.bf16.msra.mxu0 %v2474
    %3092 = vmatprep.subr.bf16.mxu0 0
    %3093 = vmatpush1.bf16.msra.mxu0 %v2475
    %3094 = vmatprep.subr.bf16.mxu0 0
    %3095 = vmatpush1.bf16.msra.mxu0 %v2476
    %3096 = vmatprep.subr.bf16.mxu0 0
    %3097 = vmatpush1.bf16.msra.mxu0 %v2477
    %3098 = vmatprep.subr.bf16.mxu0 0
    %3099 = vmatpush1.bf16.msra.mxu0 %v2478
    %3100 = vmatprep.subr.bf16.mxu0 0
    %3101 = vmatpush1.bf16.msra.mxu0 %v2479
    %3102 = vmatprep.subr.bf16.mxu0 0
    %3103 = vmatpush1.bf16.msra.mxu0 %v2480
    %3104 = vmatprep.subr.bf16.mxu0 0
    %3105 = vmatpush1.bf16.msra.mxu0 %v2481
    %3106 = vmatprep.subr.bf16.mxu0 0
    %3107 = vmatpush1.bf16.msra.mxu0 %v2482
    %3108 = vmatprep.subr.bf16.mxu0 0
    %3109 = vmatpush1.bf16.msra.mxu0 %v2483
    %3110 = vmatprep.subr.bf16.mxu0 0
    %3111 = vmatpush1.bf16.msra.mxu0 %v2484
    %3112 = vmatprep.subr.bf16.mxu0 0
    %3113 = vmatpush1.bf16.msra.mxu0 %v2485
    %3114 = vmatprep.mubr.bf16.mxu0 %v840
    %3115 = vmatmul.mubr.bf16.gmra.mrb[0].mxu0 %v839
    %v3116 = vpop.f32.mrb[0].mxu0
    %v3117 = vadd.f32 %v3076, %v3116
    %v3118 = vpop.f32.mrb[0].mxu0
    %v3119 = vpop.f32.mrb[0].mxu0
    %v3120 = vadd.f32 %v3079, %v3119
    %v3121 = vpop.f32.mrb[0].mxu0
    %3122 = vdwg.mxu0
    %3123 = vmatprep.subr.bf16.mxu0 0
    %3124 = vmatpush1.bf16.msra.mxu0 %v2486
    %3125 = vmatprep.subr.bf16.mxu0 0
    %3126 = vmatpush1.bf16.msra.mxu0 %v2487
    %3127 = vmatprep.subr.bf16.mxu0 0
    %3128 = vmatpush1.bf16.msra.mxu0 %v2488
    %3129 = vmatprep.subr.bf16.mxu0 0
    %3130 = vmatpush1.bf16.msra.mxu0 %v2489
    %3131 = vmatprep.subr.bf16.mxu0 0
    %3132 = vmatpush1.bf16.msra.mxu0 %v2490
    %3133 = vmatprep.subr.bf16.mxu0 0
    %3134 = vmatpush1.bf16.msra.mxu0 %v2491
    %3135 = vmatprep.subr.bf16.mxu0 0
    %3136 = vmatpush1.bf16.msra.mxu0 %v2492
    %3137 = vmatprep.subr.bf16.mxu0 0
    %3138 = vmatpush1.bf16.msra.mxu0 %v2493
    %3139 = vmatprep.subr.bf16.mxu0 0
    %3140 = vmatpush1.bf16.msra.mxu0 %v2494
    %3141 = vmatprep.subr.bf16.mxu0 0
    %3142 = vmatpush1.bf16.msra.mxu0 %v2495
    %3143 = vmatprep.subr.bf16.mxu0 0
    %3144 = vmatpush1.bf16.msra.mxu0 %v2496
    %3145 = vmatprep.subr.bf16.mxu0 0
    %3146 = vmatpush1.bf16.msra.mxu0 %v2497
    %3147 = vmatprep.subr.bf16.mxu0 0
    %3148 = vmatpush1.bf16.msra.mxu0 %v2498
    %3149 = vmatprep.subr.bf16.mxu0 0
    %3150 = vmatpush1.bf16.msra.mxu0 %v2499
    %3151 = vmatprep.subr.bf16.mxu0 0
    %3152 = vmatpush1.bf16.msra.mxu0 %v2500
    %3153 = vmatprep.subr.bf16.mxu0 0
    %3154 = vmatpush1.bf16.msra.mxu0 %v2501
    %3155 = vmatprep.mubr.bf16.mxu0 %v842
    %3156 = vmatmul.mubr.bf16.gmra.mrb[0].mxu0 %v841
    %v3157 = vpop.f32.mrb[0].mxu0
    %v3158 = vadd.f32 %v3117, %v3157
    %v3159 = vpop.f32.mrb[0].mxu0
    %v3160 = vpop.f32.mrb[0].mxu0
    %v3161 = vadd.f32 %v3120, %v3160
    %v3162 = vpop.f32.mrb[0].mxu0
    %3163 = vdwg.mxu0
    %3164 = vmatprep.subr.bf16.mxu0 0
    %3165 = vmatpush1.bf16.msra.mxu0 %v2502
    %3166 = vmatprep.subr.bf16.mxu0 0
    %3167 = vmatpush1.bf16.msra.mxu0 %v2503
    %3168 = vmatprep.subr.bf16.mxu0 0
    %3169 = vmatpush1.bf16.msra.mxu0 %v2504
    %3170 = vmatprep.subr.bf16.mxu0 0
    %3171 = vmatpush1.bf16.msra.mxu0 %v2505
    %3172 = vmatprep.subr.bf16.mxu0 0
    %3173 = vmatpush1.bf16.msra.mxu0 %v2506
    %3174 = vmatprep.subr.bf16.mxu0 0
    %3175 = vmatpush1.bf16.msra.mxu0 %v2507
    %3176 = vmatprep.subr.bf16.mxu0 0
    %3177 = vmatpush1.bf16.msra.mxu0 %v2508
    %3178 = vmatprep.subr.bf16.mxu0 0
    %3179 = vmatpush1.bf16.msra.mxu0 %v2509
    %3180 = vmatprep.subr.bf16.mxu0 0
    %3181 = vmatpush1.bf16.msra.mxu0 %v2510
    %3182 = vmatprep.subr.bf16.mxu0 0
    %3183 = vmatpush1.bf16.msra.mxu0 %v2511
    %3184 = vmatprep.subr.bf16.mxu0 0
    %3185 = vmatpush1.bf16.msra.mxu0 %v2512
    %3186 = vmatprep.subr.bf16.mxu0 0
    %3187 = vmatpush1.bf16.msra.mxu0 %v2513
    %3188 = vmatprep.subr.bf16.mxu0 0
    %3189 = vmatpush1.bf16.msra.mxu0 %v2514
    %3190 = vmatprep.subr.bf16.mxu0 0
    %3191 = vmatpush1.bf16.msra.mxu0 %v2515
    %3192 = vmatprep.subr.bf16.mxu0 0
    %3193 = vmatpush1.bf16.msra.mxu0 %v2516
    %3194 = vmatprep.subr.bf16.mxu0 0
    %3195 = vmatpush1.bf16.msra.mxu0 %v2517
    %3196 = vmatprep.mubr.bf16.mxu0 %v844
    %3197 = vmatmul.mubr.bf16.gmra.mrb[0].mxu0 %v843
    %v3198 = vpop.f32.mrb[0].mxu0
    %v3199 = vadd.f32 %v3158, %v3198
    %v3200 = vpop.f32.mrb[0].mxu0
    %v3201 = vpop.f32.mrb[0].mxu0
    %v3202 = vadd.f32 %v3161, %v3201
    %v3203 = vpop.f32.mrb[0].mxu0
    %3204 = vdwg.mxu0
    %3205 = vmatprep.subr.bf16.mxu0 0
    %3206 = vmatpush1.bf16.msra.mxu0 %v2518
    %3207 = vmatprep.subr.bf16.mxu0 0
    %3208 = vmatpush1.bf16.msra.mxu0 %v2519
    %3209 = vmatprep.subr.bf16.mxu0 0
    %3210 = vmatpush1.bf16.msra.mxu0 %v2520
    %3211 = vmatprep.subr.bf16.mxu0 0
    %3212 = vmatpush1.bf16.msra.mxu0 %v2521
    %3213 = vmatprep.subr.bf16.mxu0 0
    %3214 = vmatpush1.bf16.msra.mxu0 %v2522
    %3215 = vmatprep.subr.bf16.mxu0 0
    %3216 = vmatpush1.bf16.msra.mxu0 %v2523
    %3217 = vmatprep.subr.bf16.mxu0 0
    %3218 = vmatpush1.bf16.msra.mxu0 %v2524
    %3219 = vmatprep.subr.bf16.mxu0 0
    %3220 = vmatpush1.bf16.msra.mxu0 %v2525
    %3221 = vmatprep.subr.bf16.mxu0 0
    %3222 = vmatpush1.bf16.msra.mxu0 %v2526
    %3223 = vmatprep.subr.bf16.mxu0 0
    %3224 = vmatpush1.bf16.msra.mxu0 %v2527
    %3225 = vmatprep.subr.bf16.mxu0 0
    %3226 = vmatpush1.bf16.msra.mxu0 %v2528
    %3227 = vmatprep.subr.bf16.mxu0 0
    %3228 = vmatpush1.bf16.msra.mxu0 %v2529
    %3229 = vmatprep.subr.bf16.mxu0 0
    %3230 = vmatpush1.bf16.msra.mxu0 %v2530
    %3231 = vmatprep.subr.bf16.mxu0 0
    %3232 = vmatpush1.bf16.msra.mxu0 %v2531
    %3233 = vmatprep.subr.bf16.mxu0 0
    %3234 = vmatpush1.bf16.msra.mxu0 %v2532
    %3235 = vmatprep.subr.bf16.mxu0 0
    %3236 = vmatpush1.bf16.msra.mxu0 %v2533
    %3237 = vmatprep.mubr.bf16.mxu0 %v846
    %3238 = vmatmul.mubr.bf16.gmra.mrb[0].mxu0 %v845
    %v3239 = vpop.f32.mrb[0].mxu0
    %v3240 = vadd.f32 %v3199, %v3239
    %v3241 = vpop.f32.mrb[0].mxu0
    %v3242 = vpop.f32.mrb[0].mxu0
    %v3243 = vadd.f32 %v3202, %v3242
    %v3244 = vpop.f32.mrb[0].mxu0
    %3245 = vdwg.mxu0
    %3246 = vmatprep.subr.bf16.mxu0 0
    %3247 = vmatpush1.bf16.msra.mxu0 %v2534
    %3248 = vmatprep.subr.bf16.mxu0 0
    %3249 = vmatpush1.bf16.msra.mxu0 %v2535
    %3250 = vmatprep.subr.bf16.mxu0 0
    %3251 = vmatpush1.bf16.msra.mxu0 %v2536
    %3252 = vmatprep.subr.bf16.mxu0 0
    %3253 = vmatpush1.bf16.msra.mxu0 %v2537
    %3254 = vmatprep.subr.bf16.mxu0 0
    %3255 = vmatpush1.bf16.msra.mxu0 %v2538
    %3256 = vmatprep.subr.bf16.mxu0 0
    %3257 = vmatpush1.bf16.msra.mxu0 %v2539
    %3258 = vmatprep.subr.bf16.mxu0 0
    %3259 = vmatpush1.bf16.msra.mxu0 %v2540
    %3260 = vmatprep.subr.bf16.mxu0 0
    %3261 = vmatpush1.bf16.msra.mxu0 %v2541
    %3262 = vmatprep.subr.bf16.mxu0 0
    %3263 = vmatpush1.bf16.msra.mxu0 %v2542
    %3264 = vmatprep.subr.bf16.mxu0 0
    %3265 = vmatpush1.bf16.msra.mxu0 %v2543
    %3266 = vmatprep.subr.bf16.mxu0 0
    %3267 = vmatpush1.bf16.msra.mxu0 %v2544
    %3268 = vmatprep.subr.bf16.mxu0 0
    %3269 = vmatpush1.bf16.msra.mxu0 %v2545
    %3270 = vmatprep.subr.bf16.mxu0 0
    %3271 = vmatpush1.bf16.msra.mxu0 %v2546
    %3272 = vmatprep.subr.bf16.mxu0 0
    %3273 = vmatpush1.bf16.msra.mxu0 %v2547
    %3274 = vmatprep.subr.bf16.mxu0 0
    %3275 = vmatpush1.bf16.msra.mxu0 %v2548
    %3276 = vmatprep.subr.bf16.mxu0 0
    %3277 = vmatpush1.bf16.msra.mxu0 %v2549
    %3278 = vmatprep.mubr.bf16.mxu0 %v848
    %3279 = vmatmul.mubr.bf16.gmra.mrb[0].mxu0 %v847
    %v3280 = vpop.f32.mrb[0].mxu0
    %v3281 = vadd.f32 %v3240, %v3280
    %v3282 = vpop.f32.mrb[0].mxu0
    %v3283 = vpop.f32.mrb[0].mxu0
    %v3284 = vadd.f32 %v3243, %v3283
    %v3285 = vpop.f32.mrb[0].mxu0
    %3286 = vdwg.mxu0
    %3287 = vmatprep.subr.bf16.mxu0 0
    %3288 = vmatpush1.bf16.msra.mxu0 %v2550
    %3289 = vmatprep.subr.bf16.mxu0 0
    %3290 = vmatpush1.bf16.msra.mxu0 %v2551
    %3291 = vmatprep.subr.bf16.mxu0 0
    %3292 = vmatpush1.bf16.msra.mxu0 %v2552
    %3293 = vmatprep.subr.bf16.mxu0 0
    %3294 = vmatpush1.bf16.msra.mxu0 %v2553
    %3295 = vmatprep.subr.bf16.mxu0 0
    %3296 = vmatpush1.bf16.msra.mxu0 %v2554
    %3297 = vmatprep.subr.bf16.mxu0 0
    %3298 = vmatpush1.bf16.msra.mxu0 %v2555
    %3299 = vmatprep.subr.bf16.mxu0 0
    %3300 = vmatpush1.bf16.msra.mxu0 %v2556
    %3301 = vmatprep.subr.bf16.mxu0 0
    %3302 = vmatpush1.bf16.msra.mxu0 %v2557
    %3303 = vmatprep.subr.bf16.mxu0 0
    %3304 = vmatpush1.bf16.msra.mxu0 %v2558
    %3305 = vmatprep.subr.bf16.mxu0 0
    %3306 = vmatpush1.bf16.msra.mxu0 %v2559
    %3307 = vmatprep.subr.bf16.mxu0 0
    %3308 = vmatpush1.bf16.msra.mxu0 %v2560
    %3309 = vmatprep.subr.bf16.mxu0 0
    %3310 = vmatpush1.bf16.msra.mxu0 %v2561
    %3311 = vmatprep.subr.bf16.mxu0 0
    %3312 = vmatpush1.bf16.msra.mxu0 %v2562
    %3313 = vmatprep.subr.bf16.mxu0 0
    %3314 = vmatpush1.bf16.msra.mxu0 %v2563
    %3315 = vmatprep.subr.bf16.mxu0 0
    %3316 = vmatpush1.bf16.msra.mxu0 %v2564
    %3317 = vmatprep.subr.bf16.mxu0 0
    %3318 = vmatpush1.bf16.msra.mxu0 %v2565
    %3319 = vmatprep.mubr.bf16.mxu0 %v850
    %3320 = vmatmul.mubr.bf16.gmra.mrb[0].mxu0 %v849
    %v3321 = vpop.f32.mrb[0].mxu0
    %v3322 = vadd.f32 %v3281, %v3321
    %v3323 = vpop.f32.mrb[0].mxu0
    %v3324 = vpop.f32.mrb[0].mxu0
    %v3325 = vadd.f32 %v3284, %v3324
    %v3326 = vpop.f32.mrb[0].mxu0
    %3327 = vdwg.mxu0
    %3328 = vmatprep.subr.bf16.mxu0 0
    %3329 = vmatpush1.bf16.msra.mxu0 %v2566
    %3330 = vmatprep.subr.bf16.mxu0 0
    %3331 = vmatpush1.bf16.msra.mxu0 %v2567
    %3332 = vmatprep.subr.bf16.mxu0 0
    %3333 = vmatpush1.bf16.msra.mxu0 %v2568
    %3334 = vmatprep.subr.bf16.mxu0 0
    %3335 = vmatpush1.bf16.msra.mxu0 %v2569
    %3336 = vmatprep.subr.bf16.mxu0 0
    %3337 = vmatpush1.bf16.msra.mxu0 %v2570
    %3338 = vmatprep.subr.bf16.mxu0 0
    %3339 = vmatpush1.bf16.msra.mxu0 %v2571
    %3340 = vmatprep.subr.bf16.mxu0 0
    %3341 = vmatpush1.bf16.msra.mxu0 %v2572
    %3342 = vmatprep.subr.bf16.mxu0 0
    %3343 = vmatpush1.bf16.msra.mxu0 %v2573
    %3344 = vmatprep.subr.bf16.mxu0 0
    %3345 = vmatpush1.bf16.msra.mxu0 %v2574
    %3346 = vmatprep.subr.bf16.mxu0 0
    %3347 = vmatpush1.bf16.msra.mxu0 %v2575
    %3348 = vmatprep.subr.bf16.mxu0 0
    %3349 = vmatpush1.bf16.msra.mxu0 %v2576
    %3350 = vmatprep.subr.bf16.mxu0 0
    %3351 = vmatpush1.bf16.msra.mxu0 %v2577
    %3352 = vmatprep.subr.bf16.mxu0 0
    %3353 = vmatpush1.bf16.msra.mxu0 %v2578
    %3354 = vmatprep.subr.bf16.mxu0 0
    %3355 = vmatpush1.bf16.msra.mxu0 %v2579
    %3356 = vmatprep.subr.bf16.mxu0 0
    %3357 = vmatpush1.bf16.msra.mxu0 %v2580
    %3358 = vmatprep.subr.bf16.mxu0 0
    %3359 = vmatpush1.bf16.msra.mxu0 %v2581
    %3360 = vmatprep.mubr.bf16.mxu0 %v852
    %3361 = vmatmul.mubr.bf16.gmra.mrb[0].mxu0 %v851
    %v3362 = vpop.f32.mrb[0].mxu0
    %v3363 = vadd.f32 %v3322, %v3362
    %v3364 = vpop.f32.mrb[0].mxu0
    %v3365 = vpop.f32.mrb[0].mxu0
    %v3366 = vadd.f32 %v3325, %v3365
    %v3367 = vpop.f32.mrb[0].mxu0
    %3368 = vdwg.mxu0
    %3369 = vmatprep.subr.bf16.mxu0 0
    %3370 = vmatpush1.bf16.msra.mxu0 %v2582
    %3371 = vmatprep.subr.bf16.mxu0 0
    %3372 = vmatpush1.bf16.msra.mxu0 %v2583
    %3373 = vmatprep.subr.bf16.mxu0 0
    %3374 = vmatpush1.bf16.msra.mxu0 %v2584
    %3375 = vmatprep.subr.bf16.mxu0 0
    %3376 = vmatpush1.bf16.msra.mxu0 %v2585
    %3377 = vmatprep.subr.bf16.mxu0 0
    %3378 = vmatpush1.bf16.msra.mxu0 %v2586
    %3379 = vmatprep.subr.bf16.mxu0 0
    %3380 = vmatpush1.bf16.msra.mxu0 %v2587
    %3381 = vmatprep.subr.bf16.mxu0 0
    %3382 = vmatpush1.bf16.msra.mxu0 %v2588
    %3383 = vmatprep.subr.bf16.mxu0 0
    %3384 = vmatpush1.bf16.msra.mxu0 %v2589
    %3385 = vmatprep.subr.bf16.mxu0 0
    %3386 = vmatpush1.bf16.msra.mxu0 %v2590
    %3387 = vmatprep.subr.bf16.mxu0 0
    %3388 = vmatpush1.bf16.msra.mxu0 %v2591
    %3389 = vmatprep.subr.bf16.mxu0 0
    %3390 = vmatpush1.bf16.msra.mxu0 %v2592
    %3391 = vmatprep.subr.bf16.mxu0 0
    %3392 = vmatpush1.bf16.msra.mxu0 %v2593
    %3393 = vmatprep.subr.bf16.mxu0 0
    %3394 = vmatpush1.bf16.msra.mxu0 %v2594
    %3395 = vmatprep.subr.bf16.mxu0 0
    %3396 = vmatpush1.bf16.msra.mxu0 %v2595
    %3397 = vmatprep.subr.bf16.mxu0 0
    %3398 = vmatpush1.bf16.msra.mxu0 %v2596
    %3399 = vmatprep.subr.bf16.mxu0 0
    %3400 = vmatpush1.bf16.msra.mxu0 %v2597
    %3401 = vmatprep.mubr.bf16.mxu0 %v854
    %3402 = vmatmul.mubr.bf16.gmra.mrb[0].mxu0 %v853
    %v3403 = vpop.f32.mrb[0].mxu0
    %v3404 = vadd.f32 %v3363, %v3403
    %v3405 = vpop.f32.mrb[0].mxu0
    %v3406 = vpop.f32.mrb[0].mxu0
    %v3407 = vadd.f32 %v3366, %v3406
    %v3408 = vpop.f32.mrb[0].mxu0
    %3409 = vdwg.mxu0
    %3410 = vmatprep.subr.bf16.mxu0 0
    %3411 = vmatpush1.bf16.msra.mxu0 %v2598
    %3412 = vmatprep.subr.bf16.mxu0 0
    %3413 = vmatpush1.bf16.msra.mxu0 %v2599
    %3414 = vmatprep.subr.bf16.mxu0 0
    %3415 = vmatpush1.bf16.msra.mxu0 %v2600
    %3416 = vmatprep.subr.bf16.mxu0 0
    %3417 = vmatpush1.bf16.msra.mxu0 %v2601
    %3418 = vmatprep.subr.bf16.mxu0 0
    %3419 = vmatpush1.bf16.msra.mxu0 %v2602
    %3420 = vmatprep.subr.bf16.mxu0 0
    %3421 = vmatpush1.bf16.msra.mxu0 %v2603
    %3422 = vmatprep.subr.bf16.mxu0 0
    %3423 = vmatpush1.bf16.msra.mxu0 %v2604
    %3424 = vmatprep.subr.bf16.mxu0 0
    %3425 = vmatpush1.bf16.msra.mxu0 %v2605
    %3426 = vmatprep.subr.bf16.mxu0 0
    %3427 = vmatpush1.bf16.msra.mxu0 %v2606
    %3428 = vmatprep.subr.bf16.mxu0 0
    %3429 = vmatpush1.bf16.msra.mxu0 %v2607
    %3430 = vmatprep.subr.bf16.mxu0 0
    %3431 = vmatpush1.bf16.msra.mxu0 %v2608
    %3432 = vmatprep.subr.bf16.mxu0 0
    %3433 = vmatpush1.bf16.msra.mxu0 %v2609
    %3434 = vmatprep.subr.bf16.mxu0 0
    %3435 = vmatpush1.bf16.msra.mxu0 %v2610
    %3436 = vmatprep.subr.bf16.mxu0 0
    %3437 = vmatpush1.bf16.msra.mxu0 %v2611
    %3438 = vmatprep.subr.bf16.mxu0 0
    %3439 = vmatpush1.bf16.msra.mxu0 %v2612
    %3440 = vmatprep.subr.bf16.mxu0 0
    %3441 = vmatpush1.bf16.msra.mxu0 %v2613
    %3442 = vmatprep.mubr.bf16.mxu0 %v856
    %3443 = vmatmul.mubr.bf16.gmra.mrb[0].mxu0 %v855
    %v3444 = vpop.f32.mrb[0].mxu0
    %v3445 = vadd.f32 %v3404, %v3444
    %v3446 = vpop.f32.mrb[0].mxu0
    %v3447 = vpop.f32.mrb[0].mxu0
    %v3448 = vadd.f32 %v3407, %v3447
    %v3449 = vpop.f32.mrb[0].mxu0
    %3450 = vdwg.mxu0
    %3451 = vmatprep.subr.bf16.mxu0 0
    %3452 = vmatpush1.bf16.msra.mxu0 %v2614
    %3453 = vmatprep.subr.bf16.mxu0 0
    %3454 = vmatpush1.bf16.msra.mxu0 %v2615
    %3455 = vmatprep.subr.bf16.mxu0 0
    %3456 = vmatpush1.bf16.msra.mxu0 %v2616
    %3457 = vmatprep.subr.bf16.mxu0 0
    %3458 = vmatpush1.bf16.msra.mxu0 %v2617
    %3459 = vmatprep.subr.bf16.mxu0 0
    %3460 = vmatpush1.bf16.msra.mxu0 %v2618
    %3461 = vmatprep.subr.bf16.mxu0 0
    %3462 = vmatpush1.bf16.msra.mxu0 %v2619
    %3463 = vmatprep.subr.bf16.mxu0 0
    %3464 = vmatpush1.bf16.msra.mxu0 %v2620
    %3465 = vmatprep.subr.bf16.mxu0 0
    %3466 = vmatpush1.bf16.msra.mxu0 %v2621
    %3467 = vmatprep.subr.bf16.mxu0 0
    %3468 = vmatpush1.bf16.msra.mxu0 %v2622
    %3469 = vmatprep.subr.bf16.mxu0 0
    %3470 = vmatpush1.bf16.msra.mxu0 %v2623
    %3471 = vmatprep.subr.bf16.mxu0 0
    %3472 = vmatpush1.bf16.msra.mxu0 %v2624
    %3473 = vmatprep.subr.bf16.mxu0 0
    %3474 = vmatpush1.bf16.msra.mxu0 %v2625
    %3475 = vmatprep.subr.bf16.mxu0 0
    %3476 = vmatpush1.bf16.msra.mxu0 %v2626
    %3477 = vmatprep.subr.bf16.mxu0 0
    %3478 = vmatpush1.bf16.msra.mxu0 %v2627
    %3479 = vmatprep.subr.bf16.mxu0 0
    %3480 = vmatpush1.bf16.msra.mxu0 %v2628
    %3481 = vmatprep.subr.bf16.mxu0 0
    %3482 = vmatpush1.bf16.msra.mxu0 %v2629
    %3483 = vmatprep.mubr.bf16.mxu0 %v858
    %3484 = vmatmul.mubr.bf16.gmra.mrb[0].mxu0 %v857
    %v3485 = vpop.f32.mrb[0].mxu0
    %v3486 = vadd.f32 %v3445, %v3485
    %v3487 = vpop.f32.mrb[0].mxu0
    %v3488 = vpop.f32.mrb[0].mxu0
    %v3489 = vadd.f32 %v3448, %v3488
    %v3490 = vpop.f32.mrb[0].mxu0
    %3491 = vdwg.mxu0
    %3492 = vmatprep.subr.bf16.mxu0 0
    %3493 = vmatpush1.bf16.msra.mxu0 %v2630
    %3494 = vmatprep.subr.bf16.mxu0 0
    %3495 = vmatpush1.bf16.msra.mxu0 %v2631
    %3496 = vmatprep.subr.bf16.mxu0 0
    %3497 = vmatpush1.bf16.msra.mxu0 %v2632
    %3498 = vmatprep.subr.bf16.mxu0 0
    %3499 = vmatpush1.bf16.msra.mxu0 %v2633
    %3500 = vmatprep.subr.bf16.mxu0 0
    %3501 = vmatpush1.bf16.msra.mxu0 %v2634
    %3502 = vmatprep.subr.bf16.mxu0 0
    %3503 = vmatpush1.bf16.msra.mxu0 %v2635
    %3504 = vmatprep.subr.bf16.mxu0 0
    %3505 = vmatpush1.bf16.msra.mxu0 %v2636
    %3506 = vmatprep.subr.bf16.mxu0 0
    %3507 = vmatpush1.bf16.msra.mxu0 %v2637
    %3508 = vmatprep.subr.bf16.mxu0 0
    %3509 = vmatpush1.bf16.msra.mxu0 %v2638
    %3510 = vmatprep.subr.bf16.mxu0 0
    %3511 = vmatpush1.bf16.msra.mxu0 %v2639
    %3512 = vmatprep.subr.bf16.mxu0 0
    %3513 = vmatpush1.bf16.msra.mxu0 %v2640
    %3514 = vmatprep.subr.bf16.mxu0 0
    %3515 = vmatpush1.bf16.msra.mxu0 %v2641
    %3516 = vmatprep.subr.bf16.mxu0 0
    %3517 = vmatpush1.bf16.msra.mxu0 %v2642
    %3518 = vmatprep.subr.bf16.mxu0 0
    %3519 = vmatpush1.bf16.msra.mxu0 %v2643
    %3520 = vmatprep.subr.bf16.mxu0 0
    %3521 = vmatpush1.bf16.msra.mxu0 %v2644
    %3522 = vmatprep.subr.bf16.mxu0 0
    %3523 = vmatpush1.bf16.msra.mxu0 %v2645
    %3524 = vmatprep.mubr.bf16.mxu0 %v860
    %3525 = vmatmul.mubr.bf16.gmra.mrb[0].mxu0 %v859
    %v3526 = vpop.f32.mrb[0].mxu0
    %v3527 = vadd.f32 %v3486, %v3526
    %v3528 = vpop.f32.mrb[0].mxu0
    %v3529 = vpop.f32.mrb[0].mxu0
    %v3530 = vadd.f32 %v3489, %v3529
    %v3531 = vpop.f32.mrb[0].mxu0
    %3532 = vdwg.mxu0
    %3533 = vmatprep.subr.bf16.mxu0 0
    %3534 = vmatpush1.bf16.msra.mxu0 %v2646
    %3535 = vmatprep.subr.bf16.mxu0 0
    %3536 = vmatpush1.bf16.msra.mxu0 %v2647
    %3537 = vmatprep.subr.bf16.mxu0 0
    %3538 = vmatpush1.bf16.msra.mxu0 %v2648
    %3539 = vmatprep.subr.bf16.mxu0 0
    %3540 = vmatpush1.bf16.msra.mxu0 %v2649
    %3541 = vmatprep.subr.bf16.mxu0 0
    %3542 = vmatpush1.bf16.msra.mxu0 %v2650
    %3543 = vmatprep.subr.bf16.mxu0 0
    %3544 = vmatpush1.bf16.msra.mxu0 %v2651
    %3545 = vmatprep.subr.bf16.mxu0 0
    %3546 = vmatpush1.bf16.msra.mxu0 %v2652
    %3547 = vmatprep.subr.bf16.mxu0 0
    %3548 = vmatpush1.bf16.msra.mxu0 %v2653
    %3549 = vmatprep.subr.bf16.mxu0 0
    %3550 = vmatpush1.bf16.msra.mxu0 %v2654
    %3551 = vmatprep.subr.bf16.mxu0 0
    %3552 = vmatpush1.bf16.msra.mxu0 %v2655
    %3553 = vmatprep.subr.bf16.mxu0 0
    %3554 = vmatpush1.bf16.msra.mxu0 %v2656
    %3555 = vmatprep.subr.bf16.mxu0 0
    %3556 = vmatpush1.bf16.msra.mxu0 %v2657
    %3557 = vmatprep.subr.bf16.mxu0 0
    %3558 = vmatpush1.bf16.msra.mxu0 %v2658
    %3559 = vmatprep.subr.bf16.mxu0 0
    %3560 = vmatpush1.bf16.msra.mxu0 %v2659
    %3561 = vmatprep.subr.bf16.mxu0 0
    %3562 = vmatpush1.bf16.msra.mxu0 %v2660
    %3563 = vmatprep.subr.bf16.mxu0 0
    %3564 = vmatpush1.bf16.msra.mxu0 %v2661
    %3565 = vmatprep.mubr.bf16.mxu0 %v862
    %3566 = vmatmul.mubr.bf16.gmra.mrb[0].mxu0 %v861
    %v3567 = vpop.f32.mrb[0].mxu0
    %v3568 = vadd.f32 %v3527, %v3567
    %v3569 = vpop.f32.mrb[0].mxu0
    %v3570 = vpop.f32.mrb[0].mxu0
    %v3571 = vadd.f32 %v3530, %v3570
    %v3572 = vpop.f32.mrb[0].mxu0
    %3573 = vdwg.mxu0
    %v3574 = vmax.f32 %v3568, 0.0
    %v3575 = vmax.f32 %v3571, 0.0
    %v3576 = vpack.c.bf16 %v3575, %v3574
    %v3577 = vld [vmem:[#allocation7] sm:$0xf]
    %v3578 = vld [vmem:[#allocation7 + $0x4] sm:$0xf]
    %v3579 = vld [vmem:[#allocation7 + $0x8] sm:$0xf]
    %v3580 = vld [vmem:[#allocation7 + $0xc] sm:$0xf]
    %v3581 = vld [vmem:[#allocation7 + $0x10] sm:$0xf]
    %v3582 = vld [vmem:[#allocation7 + $0x14] sm:$0xf]
    %v3583 = vld [vmem:[#allocation7 + $0x18] sm:$0xf]
    %v3584 = vld [vmem:[#allocation7 + $0x1c] sm:$0xf]
    %v3585 = vld [vmem:[#allocation7 + $0x20] sm:$0xf]
    %v3586 = vld [vmem:[#allocation7 + $0x24] sm:$0xf]
    %v3587 = vld [vmem:[#allocation7 + $0x28] sm:$0xf]
    %v3588 = vld [vmem:[#allocation7 + $0x2c] sm:$0xf]
    %v3589 = vld [vmem:[#allocation7 + $0x30] sm:$0xf]
    %v3590 = vld [vmem:[#allocation7 + $0x34] sm:$0xf]
    %v3591 = vld [vmem:[#allocation7 + $0x38] sm:$0xf]
    %v3592 = vld [vmem:[#allocation7 + $0x3c] sm:$0xf]
    %v3593 = vld [vmem:[%s4] sm:$0x1]
    %v3595 = vlaneseq
    %v3596 = vshrl.u32 %v3595, 7
    %v3597 = vsub.s32 0, %v3596
    %v3598 = vrot.slane %v3593, %v3597
    %v3616 = vunpack.c.l.b16 %v3577
    %v3617 = vunpack.c.l.b16 %v3578
    %v3618 = vunpack.c.l.b16 %v3579
    %v3619 = vunpack.c.l.b16 %v3580
    %v3620 = vunpack.c.l.b16 %v3581
    %v3621 = vunpack.c.l.b16 %v3582
    %v3622 = vunpack.c.l.b16 %v3583
    %v3623 = vunpack.c.l.b16 %v3584
    %v3624 = vunpack.c.l.b16 %v3585
    %v3625 = vunpack.c.l.b16 %v3586
    %v3626 = vunpack.c.l.b16 %v3587
    %v3627 = vunpack.c.l.b16 %v3588
    %v3628 = vunpack.c.l.b16 %v3589
    %v3629 = vunpack.c.l.b16 %v3590
    %v3630 = vunpack.c.l.b16 %v3591
    %v3631 = vunpack.c.l.b16 %v3592
    %v3632 = vpack.c.b16 %v3617, %v3616
    %v3633 = vpack.c.b16 %v3619, %v3618
    %v3634 = vpack.c.b16 %v3621, %v3620
    %v3635 = vpack.c.b16 %v3623, %v3622
    %v3636 = vpack.c.b16 %v3625, %v3624
    %v3637 = vpack.c.b16 %v3627, %v3626
    %v3638 = vpack.c.b16 %v3629, %v3628
    %v3639 = vpack.c.b16 %v3631, %v3630
    %3648 = vmatprep.subr.bf16.mxu0 0
    %3649 = vmatpush1.bf16.msra.mxu0 %v3632
    %3650 = vmatprep.subr.bf16.mxu0 0
    %3651 = vmatpush1.bf16.msra.mxu0 %v3633
    %3652 = vmatprep.subr.bf16.mxu0 0
    %3653 = vmatpush1.bf16.msra.mxu0 %v3634
    %3654 = vmatprep.subr.bf16.mxu0 0
    %3655 = vmatpush1.bf16.msra.mxu0 %v3635
    %3656 = vmatprep.subr.bf16.mxu0 0
    %3657 = vmatpush1.bf16.msra.mxu0 %v3636
    %3658 = vmatprep.subr.bf16.mxu0 0
    %3659 = vmatpush1.bf16.msra.mxu0 %v3637
    %3660 = vmatprep.subr.bf16.mxu0 0
    %3661 = vmatpush1.bf16.msra.mxu0 %v3638
    %3662 = vmatprep.subr.bf16.mxu0 0
    %3663 = vmatpush1.bf16.msra.mxu0 %v3639
    %3664 = vmatprep.subr.bf16.mxu0 0
    %3665 = vmatpush1.bf16.msra.mxu0 0
    %3666 = vmatprep.subr.bf16.mxu0 0
    %3667 = vmatpush1.bf16.msra.mxu0 0
    %3668 = vmatprep.subr.bf16.mxu0 0
    %3669 = vmatpush1.bf16.msra.mxu0 0
    %3670 = vmatprep.subr.bf16.mxu0 0
    %3671 = vmatpush1.bf16.msra.mxu0 0
    %3672 = vmatprep.subr.bf16.mxu0 0
    %3673 = vmatpush1.bf16.msra.mxu0 0
    %3674 = vmatprep.subr.bf16.mxu0 0
    %3675 = vmatpush1.bf16.msra.mxu0 0
    %3676 = vmatprep.subr.bf16.mxu0 0
    %3677 = vmatpush1.bf16.msra.mxu0 0
    %3678 = vmatprep.subr.bf16.mxu0 0
    %3679 = vmatpush1.bf16.msra.mxu0 0
    %3680 = vmatprep.mubr.bf16.mxu0 0
    %3681 = vmatmul.mubr.bf16.gmra.mrb[0].mxu0 %v3576
    %v3682 = vpop.f32.mrb[0].mxu0
    %v3683 = vadd.f32 %v3598, %v3682
    %v3684 = vpop.f32.mrb[0].mxu0
    %v3685 = vpop.f32.mrb[0].mxu0
    %v3686 = vadd.f32 %v3598, %v3685
    %v3687 = vpop.f32.mrb[0].mxu0
    %3688 = vdwg.mxu0
    %v3689 = vmax.f32 %v3683, 0.0
    %v3690 = vmax.f32 %v3686, 0.0
    %v3691 = vpack.c.bf16 %v3690, %v3689
    %v3693 = vcombine.high %v3691, %v3691
    %v3695 = vunpack.c.l.s4 1966171168
    %v3696 = vunpack.c.0.s8 %v3695
    %v3697 = vlaneseq
    %v3698 = vshrl.u32 %v3697, 7
    %v3699 = vsub.s32 %v3696, %v3698
    %v3700 = vrot.slane %v3691, %v3699
    %v3702 = vunpack.c.l.s4 1966171168
    %v3703 = vunpack.c.0.s8 %v3702
    %v3704 = vlaneseq
    %v3705 = vshrl.u32 %v3704, 7
    %v3706 = vsub.s32 %v3703, %v3705
    %v3707 = vrot.slane %v3693, %v3706
    %v3708 = vcombine.high %v3700, %v3700
    %v3709 = vcombine.high %v3707, %v3707
    %v3711 = vunpack.c.l.s4 1966171168
    %v3712 = vunpack.c.0.s8 %v3711
    %v3713 = vlaneseq
    %v3714 = vshrl.u32 %v3713, 7
    %v3715 = vsub.s32 %v3712, %v3714
    %v3716 = vrot.slane %v3700, %v3715
    %v3718 = vunpack.c.l.s4 1966171168
    %v3719 = vunpack.c.0.s8 %v3718
    %v3720 = vlaneseq
    %v3721 = vshrl.u32 %v3720, 7
    %v3722 = vsub.s32 %v3719, %v3721
    %v3723 = vrot.slane %v3707, %v3722
    %v3725 = vunpack.c.l.s4 1966171168
    %v3726 = vunpack.c.0.s8 %v3725
    %v3727 = vlaneseq
    %v3728 = vshrl.u32 %v3727, 7
    %v3729 = vsub.s32 %v3726, %v3728
    %v3730 = vrot.slane %v3708, %v3729
    %v3732 = vunpack.c.l.s4 1966171168
    %v3733 = vunpack.c.0.s8 %v3732
    %v3734 = vlaneseq
    %v3735 = vshrl.u32 %v3734, 7
    %v3736 = vsub.s32 %v3733, %v3735
    %v3737 = vrot.slane %v3709, %v3736
    %v3738 = vcombine.high %v3716, %v3716
    %v3739 = vcombine.high %v3723, %v3723
    %v3740 = vcombine.high %v3730, %v3730
    %v3741 = vcombine.high %v3737, %v3737
    %3750 = vst [vmem:[#allocation8] sm:$0x1] %v3716
    %3751 = vst [vmem:[#allocation8 + $0x1] sm:$0x1] %v3730
    %3752 = vst [vmem:[#allocation8 + $0x2] sm:$0x1] %v3738
    %3753 = vst [vmem:[#allocation8 + $0x3] sm:$0x1] %v3740
    %3754 = vst [vmem:[#allocation8 + $0x4] sm:$0x1] %v3723
    %3755 = vst [vmem:[#allocation8 + $0x5] sm:$0x1] %v3737
    %3756 = vst [vmem:[#allocation8 + $0x6] sm:$0x1] %v3739
    %3757 = vst [vmem:[#allocation8 + $0x7] sm:$0x1] %v3741
    // Predicated region
    $region34: #{tpu_custom_call.1} parent=1 // pred_check
      _
    $region35: #{tpu_custom_call.1} parent=1 // pred_check_branch
      %3759 = sbr.rel (0) target = $region37
    $region36: #{tpu_custom_call.1} parent=1 // pred_region
      %s3761 = ssub.s32 128, 16
      %3762 = vsyncadd [#allocation4], %s3761
      %s3763 = sshll.u32 [#allocation8], 4
      %s3764 = int_to_ptr.vmem [resolvable:$true] %s3763
      %3769 = dma.vmem_to_hbm [thread:$0]  %s3764, 16, %s5, [#allocation4], 16, 16, 1
    $region37: #{tpu_custom_call.1} parent=1 // pred_fallthru
      _
    // Predicated region
    $region38: #{tpu_custom_call.1} parent=1 // pred_check
      _
    $region39: #{tpu_custom_call.1} parent=1 // pred_check_branch
      %3771 = sbr.rel (0) target = $region41
    $region40: #{tpu_custom_call.1} parent=1 // pred_region
      %3772 = dma.done [#allocation4], 128
    $region41: #{tpu_custom_call.1} parent=1 // pred_fallthru
      _
    %3773 = vsyncpa [#allocation3], 1
    %3774 = vsyncpa [#allocation6], 1
    %3775 = vsyncpa [#allocation4], 1

</llo_original>
